<compile_context>
chip_gen: v7x
topology: tpu7x:2x2x1
jax: 0.10.0
libtpu: 0.0.40
codegen_flags: <defaults>
</compile_context>

<pallas_src>
import math
import functools

import jax
import jax.numpy as jnp
from jax import lax
from jax.experimental import pallas as pl
from jax.experimental.pallas import tpu as pltpu


def _self_attention_kernel(x_ref, w_qkv_ref, b_qkv_ref, wo_ref, bo_ref,
                           o_ref,
                           q_sc, k_sc, v_sc,
                           *, n_heads, d_head, block_q, causal, mxu_bf16):
    # Per grid step (b, qi):
    #   x_ref    : (1, S, D) full sequence for this batch (resident over qi)
    #   w_qkv_ref: (D, 3D) fused in_proj weight, b_qkv_ref: (1, 3D)
    #   wo_ref   : (D, D) out_proj weight,       bo_ref:    (1, D)
    #   q_sc/k_sc/v_sc: (S, D) VMEM scratch carried across the qi axis
    in_dt = x_ref.dtype
    cdt = jnp.bfloat16 if (mxu_bf16 and in_dt == jnp.float32) else in_dt

    d_model = q_sc.shape[-1]
    s_len = k_sc.shape[0]
    qi = pl.program_id(1)

    # ---- project Q/K/V for the whole sequence ONCE per batch element ----
    @pl.when(qi == 0)
    def _():
        x_full = x_ref[0].astype(cdt)                           # (S, D)
        qkv = jnp.dot(x_full, w_qkv_ref[...].astype(cdt),
                      preferred_element_type=jnp.float32)        # (S, 3D) f32
        qkv = qkv + b_qkv_ref[...].astype(jnp.float32)
        # 1/sqrt(d_head) folded into q once; slices are lane-aligned
        # (D is a multiple of 128) so they are free vreg slices.
        q_sc[...] = (qkv[:, :d_model] * (1.0 / math.sqrt(d_head))).astype(cdt)
        k_sc[...] = qkv[:, d_model:2 * d_model].astype(cdt)
        v_sc[...] = qkv[:, 2 * d_model:].astype(cdt)

    q0 = pl.multiple_of(qi * block_q, block_q)
    q_tile = q_sc[pl.ds(q0, block_q), :]                         # (Tq, D) cdt
    k_full = k_sc[...]                                           # (S,  D) cdt
    v_full = v_sc[...]                                           # (S,  D) cdt

    if causal:
        row = lax.broadcasted_iota(jnp.int32, (block_q, s_len), 0) + q0
        col = lax.broadcasted_iota(jnp.int32, (block_q, s_len), 1)
        keep = col <= row                                        # triu(1) masked

    # ---- per-head attention; outputs concatenated in-register ----
    dn = (((1,), (1,)), ((), ()))                                # contract last axes
    heads = []
    for h in range(n_heads):
        lo = h * d_head
        q_h = q_tile[:, lo:lo + d_head]                          # (Tq, dh)
        k_h = k_full[:, lo:lo + d_head]                          # (S,  dh)
        v_h = v_full[:, lo:lo + d_head]                          # (S,  dh)

        s = lax.dot_general(q_h, k_h, dn,
                            preferred_element_type=jnp.float32)  # (Tq, S) f32
        if causal:
            s = jnp.where(keep, s, -jnp.inf)

        # softmax statistics in f32
        m = jnp.max(s, axis=-1, keepdims=True)
        e = jnp.exp(s - m)
        l = jnp.sum(e, axis=-1, keepdims=True)
        # reciprocal on the EUP; one Newton step restores full f32 accuracy
        r = pl.reciprocal(l, approx=True)
        r = r * (2.0 - l * r)

        o_h = jnp.dot(e.astype(cdt), v_h,
                      preferred_element_type=jnp.float32) * r    # (Tq, dh) f32
        heads.append(o_h.astype(cdt))

    attn = jnp.concatenate(heads, axis=-1)                       # (Tq, D) lane-dense

    # ---- one full-K out_proj matmul over the concatenated heads ----
    y = jnp.dot(attn, wo_ref[...].astype(cdt),
                preferred_element_type=jnp.float32)
    y = y + bo_ref[...].astype(jnp.float32)
    o_ref[0] = y.astype(o_ref.dtype)


def _pick_vmem_limit():
    """~75% of the physical VMEM of the current generation (headroom for
    Mosaic internal scratch / pipeline buffers): ~48 MiB v7x, ~96 MiB v5e/v6e."""
    cap = 64 * 1024 * 1024
    try:
        info = pltpu.get_tpu_info()
        cap = int(getattr(info, "vmem_capacity_bytes", cap))
    except Exception:
        pass
    return min(cap * 3 // 4, 112 * 1024 * 1024)


def self_attention(x, w_in, b_in, w_out, b_out, *, n_heads,
                   causal_mask=False, block_q=None, mxu_bf16=False):
    """x: (B, S, D); w_in: (D, 3D); b_in: (3D,); w_out: (D, D); b_out: (D,)."""
    B, S, D = x.shape
    assert D % n_heads == 0
    d_head = D // n_heads

    if block_q is None:
        block_q = min(S, 512)
    block_q = min(block_q, S)
    assert S % block_q == 0, "block_q must divide the sequence length"
    nq = S // block_q

    b_qkv = b_in.reshape(1, 3 * D)
    b_o = b_out.reshape(1, D)

    cdt = jnp.bfloat16 if (mxu_bf16 and x.dtype == jnp.float32) else x.dtype

    kernel = functools.partial(_self_attention_kernel,
                               n_heads=n_heads, d_head=d_head,
                               block_q=block_q, causal=bool(causal_mask),
                               mxu_bf16=mxu_bf16)

    const2 = lambda b, i: (0, 0)

    def weight_spec(shape):
        # grid-invariant operand: single-buffer to halve its VMEM residency
        return pl.BlockSpec(shape, const2, pipeline_mode=pl.Buffered(1))

    return pl.pallas_call(
        kernel,
        out_shape=jax.ShapeDtypeStruct((B, S, D), x.dtype),
        grid_spec=pltpu.PrefetchScalarGridSpec(
            num_scalar_prefetch=0,
            grid=(B, nq),
            in_specs=[
                pl.BlockSpec((1, S, D), lambda b, i: (b, 0, 0)),  # x, resident/batch
                weight_spec((D, 3 * D)),                          # fused w_qkv
                weight_spec((1, 3 * D)),                          # fused b_qkv
                weight_spec((D, D)),                              # w_out
                weight_spec((1, D)),                              # b_out
            ],
            out_specs=pl.BlockSpec((1, block_q, D), lambda b, i: (b, i, 0)),
            scratch_shapes=[pltpu.VMEM((S, D), cdt),   # q (carried across qi)
                            pltpu.VMEM((S, D), cdt),   # k
                            pltpu.VMEM((S, D), cdt)],  # v
        ),
        compiler_params=pltpu.CompilerParams(
            # batch axis feeds megacore; qi must stay sequential ("arbitrary")
            # because the q/k/v scratch carries across query tiles.
            dimension_semantics=("parallel", "arbitrary"),
            vmem_limit_bytes=_pick_vmem_limit(),
        ),
    )(x, w_in, b_qkv, w_out, b_o)


def _reference(x, w_in, b_in, w_out, b_out, *, n_heads, causal_mask=False):
    # pure-JAX reference mirroring the PyTorch forward exactly
    B, S, D = x.shape
    dh = D // n_heads
    qkv = x @ w_in + b_in
    q, k, v = jnp.split(qkv, 3, axis=-1)
    q = q.reshape(B, S, n_heads, dh).transpose(0, 2, 1, 3)
    k = k.reshape(B, S, n_heads, dh).transpose(0, 2, 1, 3)
    v = v.reshape(B, S, n_heads, dh).transpose(0, 2, 1, 3)
    w = jnp.einsum('bhqd,bhkd->bhqk', q, k)
    if causal_mask:
        qi = jnp.arange(S)[:, None]
        ki = jnp.arange(S)[None, :]
        w = jnp.where(ki > qi, -jnp.inf, w)
    w = w / math.sqrt(dh)
    w = jax.nn.softmax(w, axis=-1)
    out = jnp.einsum('bhqk,bhkd->bhqd', w, v)
    out = out.transpose(0, 2, 1, 3).reshape(B, S, D)
    return out @ w_out + b_out


if __name__ == "__main__":
    # Small but lane-dense shapes (D = 128 keeps output stores unmasked);
    # block_q=32 exercises the multi-query-tile / carried-K/V grid path.
    B, S, D, H = 2, 64, 128, 4

    key = jax.random.PRNGKey(0)
    kx, kwi, kbi, kwo, kbo = jax.random.split(key, 5)

    bound = 1.0 / math.sqrt(D)
    x = jax.random.normal(kx, (B, S, D), dtype=jnp.float32)
    w_in = jax.random.uniform(kwi, (D, 3 * D), jnp.float32, -bound, bound)
    b_in = jax.random.uniform(kbi, (3 * D,), jnp.float32, -bound, bound)
    w_out = jax.random.uniform(kwo, (D, D), jnp.float32, -bound, bound)
    b_out = jax.random.uniform(kbo, (D,), jnp.float32, -bound, bound)

    ok = True

    # fp32 path: causal and non-causal, 2 query tiles per batch element so the
    # K/V projection carried in scratch across the "arbitrary" qi axis is hit.
    for causal in (False, True):
        y = self_attention(x, w_in, b_in, w_out, b_out,
                           n_heads=H, causal_mask=causal, block_q=32)
        y = jax.block_until_ready(y)
        y_ref = _reference(x, w_in, b_in, w_out, b_out,
                           n_heads=H, causal_mask=causal)
        ok = ok and bool(jnp.allclose(y, y_ref, atol=1e-4, rtol=1e-4))

    # bf16 path: native-dtype MXU operands with f32 accumulation.
    xb = x.astype(jnp.bfloat16)
    w_in16 = w_in.astype(jnp.bfloat16)
    b_in16 = b_in.astype(jnp.bfloat16)
    w_out16 = w_out.astype(jnp.bfloat16)
    b_out16 = b_out.astype(jnp.bfloat16)
    y16 = self_attention(xb, w_in16, b_in16, w_out16, b_out16,
                         n_heads=H, causal_mask=True, block_q=32)
    y16 = jax.block_until_ready(y16)
    y16_ref = _reference(xb.astype(jnp.float32), w_in16.astype(jnp.float32),
                         b_in16.astype(jnp.float32), w_out16.astype(jnp.float32),
                         b_out16.astype(jnp.float32),
                         n_heads=H, causal_mask=True)
    ok = ok and bool(jnp.allclose(y16.astype(jnp.float32), y16_ref,
                                  atol=5e-2, rtol=5e-2))

    # f32 inputs with bf16 MXU operands (v5e/v6e throughput mode), default
    # block_q (single query tile) path.
    ymx = self_attention(x, w_in, b_in, w_out, b_out,
                         n_heads=H, causal_mask=True, mxu_bf16=True)
    ymx = jax.block_until_ready(ymx)
    ymx_ref = _reference(x, w_in, b_in, w_out, b_out,
                         n_heads=H, causal_mask=True)
    ok = ok and bool(jnp.allclose(ymx, ymx_ref, atol=5e-2, rtol=5e-2))

    if ok:
        print("KERNEL_OK")
    else:
        print("KERNEL_MISMATCH")
</pallas_src>

<mosaic_0001>
module attributes {stable_mosaic.version = 11 : i64} {
  func.func @_self_attention_kernel(%arg0: i32, %arg1: i32, %arg2: memref<1x64x128xf32, #tpu.memory_space<vmem>>, %arg3: memref<128x384xf32, #tpu.memory_space<vmem>>, %arg4: memref<1x384xf32, #tpu.memory_space<vmem>>, %arg5: memref<128x128xf32, #tpu.memory_space<vmem>>, %arg6: memref<1x128xf32, #tpu.memory_space<vmem>>, %arg7: memref<1x32x128xf32, #tpu.memory_space<vmem>>, %arg8: memref<64x128xf32, #tpu.memory_space<vmem>>, %arg9: memref<64x128xf32, #tpu.memory_space<vmem>>, %arg10: memref<64x128xf32, #tpu.memory_space<vmem>>) attributes {dimension_semantics = [#tpu.dimension_semantics<parallel>, #tpu.dimension_semantics<arbitrary>], iteration_bounds = array<i64: 2, 2>, scalar_prefetch = 0 : i64, scratch_operands = 3 : i64, tpu.core_type = #tpu.core_type<tc>, window_params = [{transform_indices = @transform_0, window_bounds = array<i64: 1, 64, 128>}, {pipeline_mode = #tpu.pipeline_mode<synchronous>, transform_indices = @transform_1, window_bounds = array<i64: 128, 384>}, {pipeline_mode = #tpu.pipeline_mode<synchronous>, transform_indices = @transform_2, window_bounds = array<i64: 1, 384>}, {pipeline_mode = #tpu.pipeline_mode<synchronous>, transform_indices = @transform_3, window_bounds = array<i64: 128, 128>}, {pipeline_mode = #tpu.pipeline_mode<synchronous>, transform_indices = @transform_4, window_bounds = array<i64: 1, 128>}, {transform_indices = @transform_5, window_bounds = array<i64: 1, 32, 128>}]} {
    %c0_i32 = arith.constant 0 : i32
    %0 = arith.cmpi eq, %arg1, %c0_i32 : i32
    %1 = arith.extui %0 : i1 to i32
    %c0_i32_0 = arith.constant 0 : i32
    %2 = arith.cmpi ne, %1, %c0_i32_0 : i32
    scf.if %2 {
      %c0_32 = arith.constant 0 : index
      %c0_33 = arith.constant 0 : index
      %c0_34 = arith.constant 0 : index
      %94 = vector.load %arg2[%c0_32, %c0_33, %c0_34] : memref<1x64x128xf32, #tpu.memory_space<vmem>>, vector<1x64x128xf32>
      %95 = vector.shape_cast %94 : vector<1x64x128xf32> to vector<64x128xf32>
      %c0_35 = arith.constant 0 : index
      %c0_36 = arith.constant 0 : index
      %96 = vector.load %arg3[%c0_35, %c0_36] : memref<128x384xf32, #tpu.memory_space<vmem>>, vector<128x384xf32>
      %cst_37 = arith.constant dense<0.000000e+00> : vector<64x384xf32>
      %97 = tpu.matmul %95, %96, %cst_37 {dimension_numbers = #tpu.dot_dimension_numbers<[1], [0], [0], [1], [0, 0, 1, 1], [], []>} : vector<64x128xf32>, vector<128x384xf32>, vector<64x384xf32> -> vector<64x384xf32>
      %c0_38 = arith.constant 0 : index
      %c0_39 = arith.constant 0 : index
      %98 = vector.load %arg4[%c0_38, %c0_39] : memref<1x384xf32, #tpu.memory_space<vmem>>, vector<1x384xf32>
      %99 = vector.broadcast %98 : vector<1x384xf32> to vector<64x384xf32>
      %100 = arith.addf %97, %99 : vector<64x384xf32>
      %101 = vector.extract_strided_slice %100 {offsets = [0, 0], sizes = [64, 128], strides = [1, 1]} : vector<64x384xf32> to vector<64x128xf32>
      %cst_40 = arith.constant 0.176776692 : f32
      %102 = vector.broadcast %cst_40 : f32 to vector<64x128xf32>
      %103 = arith.mulf %101, %102 : vector<64x128xf32>
      %c0_41 = arith.constant 0 : index
      %c0_42 = arith.constant 0 : index
      %104 = vector.load %arg8[%c0_41, %c0_42] : memref<64x128xf32, #tpu.memory_space<vmem>>, vector<64x128xf32>
      tpu.vector_store %arg8[%c0_41, %c0_42], %103 {strides = array<i32>} : memref<64x128xf32, #tpu.memory_space<vmem>>, vector<64x128xf32>,
      %105 = vector.extract_strided_slice %100 {offsets = [0, 128], sizes = [64, 128], strides = [1, 1]} : vector<64x384xf32> to vector<64x128xf32>
      %c0_43 = arith.constant 0 : index
      %c0_44 = arith.constant 0 : index
      %106 = vector.load %arg9[%c0_43, %c0_44] : memref<64x128xf32, #tpu.memory_space<vmem>>, vector<64x128xf32>
      tpu.vector_store %arg9[%c0_43, %c0_44], %105 {strides = array<i32>} : memref<64x128xf32, #tpu.memory_space<vmem>>, vector<64x128xf32>,
      %107 = vector.extract_strided_slice %100 {offsets = [0, 256], sizes = [64, 128], strides = [1, 1]} : vector<64x384xf32> to vector<64x128xf32>
      %c0_45 = arith.constant 0 : index
      %c0_46 = arith.constant 0 : index
      %108 = vector.load %arg10[%c0_45, %c0_46] : memref<64x128xf32, #tpu.memory_space<vmem>>, vector<64x128xf32>
      tpu.vector_store %arg10[%c0_45, %c0_46], %107 {strides = array<i32>} : memref<64x128xf32, #tpu.memory_space<vmem>>, vector<64x128xf32>,
    } else {
    }
    %c32_i32 = arith.constant 32 : i32
    %3 = arith.muli %arg1, %c32_i32 : i32
    %4 = tpu.assume_multiple %3, 32 : i32
    %5 = arith.index_cast %4 : i32 to index
    %c0 = arith.constant 0 : index
    %6 = vector.load %arg8[%5, %c0] : memref<64x128xf32, #tpu.memory_space<vmem>>, vector<32x128xf32>
    %c0_1 = arith.constant 0 : index
    %c0_2 = arith.constant 0 : index
    %7 = vector.load %arg9[%c0_1, %c0_2] : memref<64x128xf32, #tpu.memory_space<vmem>>, vector<64x128xf32>
    %c0_3 = arith.constant 0 : index
    %c0_4 = arith.constant 0 : index
    %8 = vector.load %arg10[%c0_3, %c0_4] : memref<64x128xf32, #tpu.memory_space<vmem>>, vector<64x128xf32>
    %9 = vector.extract_strided_slice %6 {offsets = [0, 0], sizes = [32, 32], strides = [1, 1]} : vector<32x128xf32> to vector<32x32xf32>
    %10 = vector.extract_strided_slice %7 {offsets = [0, 0], sizes = [64, 32], strides = [1, 1]} : vector<64x128xf32> to vector<64x32xf32>
    %11 = vector.extract_strided_slice %8 {offsets = [0, 0], sizes = [64, 32], strides = [1, 1]} : vector<64x128xf32> to vector<64x32xf32>
    %cst = arith.constant dense<0.000000e+00> : vector<32x64xf32>
    %12 = tpu.matmul %9, %10, %cst {dimension_numbers = #tpu.dot_dimension_numbers<[1], [1], [0], [0], [0, 0, 1, 0], [], []>} : vector<32x32xf32>, vector<64x32xf32>, vector<32x64xf32> -> vector<32x64xf32>
    %cst_5 = arith.constant dense<0xFF800000> : vector<32xf32>
    %13 = vector.multi_reduction <maximumf>, %12, %cst_5 [1] : vector<32x64xf32> to vector<32xf32>
    %14 = vector.shape_cast %13 : vector<32xf32> to vector<32x1xf32>
    %15 = vector.broadcast %14 : vector<32x1xf32> to vector<32x64xf32>
    %16 = arith.subf %12, %15 : vector<32x64xf32>
    %17 = math.exp %16 : vector<32x64xf32>
    %cst_6 = arith.constant dense<0.000000e+00> : vector<32xf32>
    %18 = vector.multi_reduction <add>, %17, %cst_6 [1] : vector<32x64xf32> to vector<32xf32>
    %19 = vector.shape_cast %18 : vector<32xf32> to vector<32x1xf32>
    %20 = tpu.reciprocal %19 {approx = true} : vector<32x1xf32> -> vector<32x1xf32>
    %21 = arith.mulf %19, %20 : vector<32x1xf32>
    %cst_7 = arith.constant 2.000000e+00 : f32
    %22 = vector.broadcast %cst_7 : f32 to vector<32x1xf32>
    %23 = arith.subf %22, %21 : vector<32x1xf32>
    %24 = arith.mulf %20, %23 : vector<32x1xf32>
    %cst_8 = arith.constant dense<0.000000e+00> : vector<32x32xf32>
    %25 = tpu.matmul %17, %11, %cst_8 {dimension_numbers = #tpu.dot_dimension_numbers<[1], [0], [0], [1], [0, 0, 1, 1], [], []>} : vector<32x64xf32>, vector<64x32xf32>, vector<32x32xf32> -> vector<32x32xf32>
    %26 = vector.broadcast %24 : vector<32x1xf32> to vector<32x32xf32>
    %27 = arith.mulf %25, %26 : vector<32x32xf32>
    %28 = vector.extract_strided_slice %6 {offsets = [0, 32], sizes = [32, 32], strides = [1, 1]} : vector<32x128xf32> to vector<32x32xf32>
    %29 = vector.extract_strided_slice %7 {offsets = [0, 32], sizes = [64, 32], strides = [1, 1]} : vector<64x128xf32> to vector<64x32xf32>
    %30 = vector.extract_strided_slice %8 {offsets = [0, 32], sizes = [64, 32], strides = [1, 1]} : vector<64x128xf32> to vector<64x32xf32>
    %cst_9 = arith.constant dense<0.000000e+00> : vector<32x64xf32>
    %31 = tpu.matmul %28, %29, %cst_9 {dimension_numbers = #tpu.dot_dimension_numbers<[1], [1], [0], [0], [0, 0, 1, 0], [], []>} : vector<32x32xf32>, vector<64x32xf32>, vector<32x64xf32> -> vector<32x64xf32>
    %cst_10 = arith.constant dense<0xFF800000> : vector<32xf32>
    %32 = vector.multi_reduction <maximumf>, %31, %cst_10 [1] : vector<32x64xf32> to vector<32xf32>
    %33 = vector.shape_cast %32 : vector<32xf32> to vector<32x1xf32>
    %34 = vector.broadcast %33 : vector<32x1xf32> to vector<32x64xf32>
    %35 = arith.subf %31, %34 : vector<32x64xf32>
    %36 = math.exp %35 : vector<32x64xf32>
    %cst_11 = arith.constant dense<0.000000e+00> : vector<32xf32>
    %37 = vector.multi_reduction <add>, %36, %cst_11 [1] : vector<32x64xf32> to vector<32xf32>
    %38 = vector.shape_cast %37 : vector<32xf32> to vector<32x1xf32>
    %39 = tpu.reciprocal %38 {approx = true} : vector<32x1xf32> -> vector<32x1xf32>
    %40 = arith.mulf %38, %39 : vector<32x1xf32>
    %cst_12 = arith.constant 2.000000e+00 : f32
    %41 = vector.broadcast %cst_12 : f32 to vector<32x1xf32>
    %42 = arith.subf %41, %40 : vector<32x1xf32>
    %43 = arith.mulf %39, %42 : vector<32x1xf32>
    %cst_13 = arith.constant dense<0.000000e+00> : vector<32x32xf32>
    %44 = tpu.matmul %36, %30, %cst_13 {dimension_numbers = #tpu.dot_dimension_numbers<[1], [0], [0], [1], [0, 0, 1, 1], [], []>} : vector<32x64xf32>, vector<64x32xf32>, vector<32x32xf32> -> vector<32x32xf32>
    %45 = vector.broadcast %43 : vector<32x1xf32> to vector<32x32xf32>
    %46 = arith.mulf %44, %45 : vector<32x32xf32>
    %47 = vector.extract_strided_slice %6 {offsets = [0, 64], sizes = [32, 32], strides = [1, 1]} : vector<32x128xf32> to vector<32x32xf32>
    %48 = vector.extract_strided_slice %7 {offsets = [0, 64], sizes = [64, 32], strides = [1, 1]} : vector<64x128xf32> to vector<64x32xf32>
    %49 = vector.extract_strided_slice %8 {offsets = [0, 64], sizes = [64, 32], strides = [1, 1]} : vector<64x128xf32> to vector<64x32xf32>
    %cst_14 = arith.constant dense<0.000000e+00> : vector<32x64xf32>
    %50 = tpu.matmul %47, %48, %cst_14 {dimension_numbers = #tpu.dot_dimension_numbers<[1], [1], [0], [0], [0, 0, 1, 0], [], []>} : vector<32x32xf32>, vector<64x32xf32>, vector<32x64xf32> -> vector<32x64xf32>
    %cst_15 = arith.constant dense<0xFF800000> : vector<32xf32>
    %51 = vector.multi_reduction <maximumf>, %50, %cst_15 [1] : vector<32x64xf32> to vector<32xf32>
    %52 = vector.shape_cast %51 : vector<32xf32> to vector<32x1xf32>
    %53 = vector.broadcast %52 : vector<32x1xf32> to vector<32x64xf32>
    %54 = arith.subf %50, %53 : vector<32x64xf32>
    %55 = math.exp %54 : vector<32x64xf32>
    %cst_16 = arith.constant dense<0.000000e+00> : vector<32xf32>
    %56 = vector.multi_reduction <add>, %55, %cst_16 [1] : vector<32x64xf32> to vector<32xf32>
    %57 = vector.shape_cast %56 : vector<32xf32> to vector<32x1xf32>
    %58 = tpu.reciprocal %57 {approx = true} : vector<32x1xf32> -> vector<32x1xf32>
    %59 = arith.mulf %57, %58 : vector<32x1xf32>
    %cst_17 = arith.constant 2.000000e+00 : f32
    %60 = vector.broadcast %cst_17 : f32 to vector<32x1xf32>
    %61 = arith.subf %60, %59 : vector<32x1xf32>
    %62 = arith.mulf %58, %61 : vector<32x1xf32>
    %cst_18 = arith.constant dense<0.000000e+00> : vector<32x32xf32>
    %63 = tpu.matmul %55, %49, %cst_18 {dimension_numbers = #tpu.dot_dimension_numbers<[1], [0], [0], [1], [0, 0, 1, 1], [], []>} : vector<32x64xf32>, vector<64x32xf32>, vector<32x32xf32> -> vector<32x32xf32>
    %64 = vector.broadcast %62 : vector<32x1xf32> to vector<32x32xf32>
    %65 = arith.mulf %63, %64 : vector<32x32xf32>
    %66 = vector.extract_strided_slice %6 {offsets = [0, 96], sizes = [32, 32], strides = [1, 1]} : vector<32x128xf32> to vector<32x32xf32>
    %67 = vector.extract_strided_slice %7 {offsets = [0, 96], sizes = [64, 32], strides = [1, 1]} : vector<64x128xf32> to vector<64x32xf32>
    %68 = vector.extract_strided_slice %8 {offsets = [0, 96], sizes = [64, 32], strides = [1, 1]} : vector<64x128xf32> to vector<64x32xf32>
    %cst_19 = arith.constant dense<0.000000e+00> : vector<32x64xf32>
    %69 = tpu.matmul %66, %67, %cst_19 {dimension_numbers = #tpu.dot_dimension_numbers<[1], [1], [0], [0], [0, 0, 1, 0], [], []>} : vector<32x32xf32>, vector<64x32xf32>, vector<32x64xf32> -> vector<32x64xf32>
    %cst_20 = arith.constant dense<0xFF800000> : vector<32xf32>
    %70 = vector.multi_reduction <maximumf>, %69, %cst_20 [1] : vector<32x64xf32> to vector<32xf32>
    %71 = vector.shape_cast %70 : vector<32xf32> to vector<32x1xf32>
    %72 = vector.broadcast %71 : vector<32x1xf32> to vector<32x64xf32>
    %73 = arith.subf %69, %72 : vector<32x64xf32>
    %74 = math.exp %73 : vector<32x64xf32>
    %cst_21 = arith.constant dense<0.000000e+00> : vector<32xf32>
    %75 = vector.multi_reduction <add>, %74, %cst_21 [1] : vector<32x64xf32> to vector<32xf32>
    %76 = vector.shape_cast %75 : vector<32xf32> to vector<32x1xf32>
    %77 = tpu.reciprocal %76 {approx = true} : vector<32x1xf32> -> vector<32x1xf32>
    %78 = arith.mulf %76, %77 : vector<32x1xf32>
    %cst_22 = arith.constant 2.000000e+00 : f32
    %79 = vector.broadcast %cst_22 : f32 to vector<32x1xf32>
    %80 = arith.subf %79, %78 : vector<32x1xf32>
    %81 = arith.mulf %77, %80 : vector<32x1xf32>
    %cst_23 = arith.constant dense<0.000000e+00> : vector<32x32xf32>
    %82 = tpu.matmul %74, %68, %cst_23 {dimension_numbers = #tpu.dot_dimension_numbers<[1], [0], [0], [1], [0, 0, 1, 1], [], []>} : vector<32x64xf32>, vector<64x32xf32>, vector<32x32xf32> -> vector<32x32xf32>
    %83 = vector.broadcast %81 : vector<32x1xf32> to vector<32x32xf32>
    %84 = arith.mulf %82, %83 : vector<32x32xf32>
    %85 = tpu.concatenate %27, %46, %65, %84 in 1 : vector<32x32xf32>, vector<32x32xf32>, vector<32x32xf32>, vector<32x32xf32> -> vector<32x128xf32>
    %c0_24 = arith.constant 0 : index
    %c0_25 = arith.constant 0 : index
    %86 = vector.load %arg5[%c0_24, %c0_25] : memref<128x128xf32, #tpu.memory_space<vmem>>, vector<128x128xf32>
    %cst_26 = arith.constant dense<0.000000e+00> : vector<32x128xf32>
    %87 = tpu.matmul %85, %86, %cst_26 {dimension_numbers = #tpu.dot_dimension_numbers<[1], [0], [0], [1], [0, 0, 1, 1], [], []>} : vector<32x128xf32>, vector<128x128xf32>, vector<32x128xf32> -> vector<32x128xf32>
    %c0_27 = arith.constant 0 : index
    %c0_28 = arith.constant 0 : index
    %88 = vector.load %arg6[%c0_27, %c0_28] : memref<1x128xf32, #tpu.memory_space<vmem>>, vector<1x128xf32>
    %89 = vector.broadcast %88 : vector<1x128xf32> to vector<32x128xf32>
    %90 = arith.addf %87, %89 : vector<32x128xf32>
    %c0_29 = arith.constant 0 : index
    %c0_30 = arith.constant 0 : index
    %c0_31 = arith.constant 0 : index
    %91 = vector.load %arg7[%c0_29, %c0_30, %c0_31] : memref<1x32x128xf32, #tpu.memory_space<vmem>>, vector<1x32x128xf32>
    %92 = vector.shape_cast %91 : vector<1x32x128xf32> to vector<32x128xf32>
    %93 = vector.shape_cast %90 : vector<32x128xf32> to vector<1x32x128xf32>
    tpu.vector_store %arg7[%c0_29, %c0_30, %c0_31], %93 {strides = array<i32>} : memref<1x32x128xf32, #tpu.memory_space<vmem>>, vector<1x32x128xf32>,
    return
  }
  func.func @transform_0(%arg0: i32, %arg1: i32) -> (i32, i32, i32) {
    %c0_i32 = arith.constant 0 : i32
    %c0_i32_0 = arith.constant 0 : i32
    %c0_i32_1 = arith.constant 0 : i32
    return %arg0, %c0_i32, %c0_i32_0 : i32, i32, i32
  }
  func.func @transform_1(%arg0: i32, %arg1: i32) -> (i32, i32) {
    %c0_i32 = arith.constant 0 : i32
    %c0_i32_0 = arith.constant 0 : i32
    %c0_i32_1 = arith.constant 0 : i32
    return %c0_i32, %c0_i32_0 : i32, i32
  }
  func.func @transform_2(%arg0: i32, %arg1: i32) -> (i32, i32) {
    %c0_i32 = arith.constant 0 : i32
    %c0_i32_0 = arith.constant 0 : i32
    %c0_i32_1 = arith.constant 0 : i32
    return %c0_i32, %c0_i32_0 : i32, i32
  }
  func.func @transform_3(%arg0: i32, %arg1: i32) -> (i32, i32) {
    %c0_i32 = arith.constant 0 : i32
    %c0_i32_0 = arith.constant 0 : i32
    %c0_i32_1 = arith.constant 0 : i32
    return %c0_i32, %c0_i32_0 : i32, i32
  }
  func.func @transform_4(%arg0: i32, %arg1: i32) -> (i32, i32) {
    %c0_i32 = arith.constant 0 : i32
    %c0_i32_0 = arith.constant 0 : i32
    %c0_i32_1 = arith.constant 0 : i32
    return %c0_i32, %c0_i32_0 : i32, i32
  }
  func.func @transform_5(%arg0: i32, %arg1: i32) -> (i32, i32, i32) {
    %c0_i32 = arith.constant 0 : i32
    %c0_i32_0 = arith.constant 0 : i32
    return %arg0, %arg1, %c0_i32 : i32, i32, i32
  }
}

</mosaic_0001>

<llo_original>
// kernel: tpu_custom_call.1
$region0: #{tpu_custom_call.1}
  #allocation0 [shape = 'u32[]', space=smem, size = 0x4, offset = 0x4, fixed_abs, tag = 'smem constant byte address 0x4 - core index']
  #allocation1 [shape = 'u32[144,128]{1,0:T(1,128)}', space=vmem, size = 0x12000, scoped, tag = 'internal scratch']
  #allocation2 [shape = 'f32[64,128]{1,0:T(8,128)}', space=vmem, size = 0x8000, scoped, tag = 'scratch operand']
  #allocation3 [shape = 'f32[64,128]{1,0:T(8,128)}', space=vmem, size = 0x8000, scoped, tag = 'scratch operand']
  #allocation4 [shape = 'f32[64,128]{1,0:T(8,128)}', space=vmem, size = 0x8000, scoped, tag = 'scratch operand']
  %s0 = inlined_call_operand.hbm [shape: f32[2,64,128], index: 0, kind: input, shape index: {}]
  %s1 = inlined_call_operand.hbm [shape: f32[128,384], index: 1, kind: input, shape index: {}]
  %s2 = inlined_call_operand.vmem [shape: f32[1,384], index: 2, kind: input, shape index: {}]
  %s3 = inlined_call_operand.hbm [shape: f32[128,128], index: 3, kind: input, shape index: {}]
  %s4 = inlined_call_operand.vmem [shape: f32[1,128], index: 4, kind: input, shape index: {}]
  %s5 = inlined_call_operand.hbm [shape: f32[2,64,128], index: 5, kind: output, shape index: {}]
  %s6 = sld [smem:[#allocation0]]
  $region69: #{tpu_custom_call.1} parent=0
    _
  %s8 = ssub.s32 1, %s6
  %s9 = scalar_select 0, %s8, %s6
  $region1: #{tpu_custom_call.1} parent=0
    #allocation5 [shape = 'u8[65536]{0}', space=vmem, size = 0x10000, scoped, tag = 'input window, operand 0']
    #allocation6 [shape = 's32[2]{0}', space=sflag, size = 0x8, scoped, tag = 'scoped memory for tpu_custom_call.1']
    #allocation7 [shape = 's32[2]{0}', space=sflag, size = 0x8, scoped, tag = 'scoped memory for tpu_custom_call.1']
    #allocation8 [shape = 'u8[196608]{0}', space=vmem, size = 0x30000, scoped, tag = 'input window, operand 1, single buffered']
    #allocation9 [shape = 's32[1]{0}', space=sflag, size = 0x4, scoped, tag = 'scoped memory for tpu_custom_call.1']
    #allocation10 [shape = 'u8[65536]{0}', space=vmem, size = 0x10000, scoped, tag = 'input window, operand 3, single buffered']
    #allocation11 [shape = 'u8[32768]{0}', space=vmem, size = 0x8000, scoped, tag = 'output window, operand 0']
    %10 = vsyncpa [#allocation6], 0
    %s11 = scalar_lea.sflag [#allocation6], 1
    %12 = vsyncpa %s11, 0
    %13 = vsyncpa [#allocation9], 0
    %14 = vsyncpa [#allocation7], 0
    %s15 = scalar_lea.sflag [#allocation7], 1
    %16 = vsyncpa %s15, 0
    loop: start=0, step=1, limit=6
    $region2: #{tpu_custom_call.1} parent=1 // loop_pre_header
      _
    $region3: #{tpu_custom_call.1} parent=1 // loop_header
      %s18 = sphi 0, %s22
      %p19 = scmp.ge.s32.totalorder %s18, 6
      %s25 = sphi 0, %s37
      %s26 = sphi 0, %s33
      %s27 = sphi 0, %s25
      %s28 = sphi 0, %s26
      %s29 = sphi 0, %s27
      %s30 = sphi 0, %s28
      %s40 = sphi 0, %s42
      %s43 = sphi 0, %s40
      %s44 = sphi 0, %s43
      %s60 = sphi 0, %s44
      %s64 = sphi 0, %s64
      %s66 = sphi 0, %s64
      %s67 = sphi 0, %s66
      %s81 = sphi 0, %s67
      %s85 = sphi 0, %s85
      %s87 = sphi 0, %s85
      %s88 = sphi 0, %s87
      %s102 = sphi 0, %s88
      %s106 = sphi 0, %s106
      %s108 = sphi 0, %s106
      %s109 = sphi 0, %s108
      %s123 = sphi 0, %s109
      %s127 = sphi 0, %s127
      %s129 = sphi 0, %s127
      %s130 = sphi 0, %s129
      %s144 = sphi 0, %s130
      %s152 = sphi 0, %s154
      %s155 = sphi 0, %s152
      %s156 = sphi 0, %s155
      %s172 = sphi 0, %s156
    $region4: #{tpu_custom_call.1} parent=1 // loop_header_branch
      %21 = sbr.rel (%p19) target = $region8
    $region5: #{tpu_custom_call.1} parent=1 // loop_body
      %s23 = ssub.s32 %s18, 1
      %s24 = ssub.s32 %s18, 2
      %s31 = sadd.s32 1, %s26
      %p32 = scmp.ge.s32.totalorder %s31, 2
      %s33 = scalar_select %p32, 0, %s31
      %s34 = sadd.s32 1, %s25
      %s35 = scalar_select %p32, %s34, %s25
      %p36 = scmp.ge.s32.totalorder %s35, 2
      %s37 = scalar_select %p36, 0, %s35
      %s38 = ssub.s32 %s25, %s37
      %p39 = scmp.eq.s32.totalorder %s38, 0
      %s41 = sadd.s32 %s40, 1
      %s42 = scalar_select %p39, %s40, %s41
      %p45 = pneg %p39
      %p46 = scmp.eq.s32.totalorder %s18, 3
      %p47 = por %p45, %p46
      %p48 = scmp.ne.s32.totalorder %s40, %s43
      %p49 = scmp.eq.s32.totalorder %s18, 0
      %p50 = por %p48, %p49
      %p51 = scmp.ne.s32.totalorder %s40, %s43
      %p52 = scmp.eq.s32.totalorder %s23, 3
      %p53 = por %p51, %p52
      %p54 = scmp.ne.s32.totalorder %s43, %s44
      %p55 = scmp.eq.s32.totalorder %s23, 0
      %p56 = por %p54, %p55
      %p57 = scmp.ne.s32.totalorder %s43, %s44
      %p58 = scmp.eq.s32.totalorder %s24, 3
      %p59 = por %p57, %p58
      %p61 = scmp.ne.s32.totalorder %s44, %s60
      %p62 = scmp.eq.s32.totalorder %s24, 0
      %p63 = por %p61, %p62
      %s65 = sadd.s32 %s64, 1
      %p68 = scmp.eq.s32.totalorder %s18, 3
      %p69 = scmp.ne.s32.totalorder %s64, %s66
      %p70 = scmp.eq.s32.totalorder %s18, 0
      %p71 = por %p69, %p70
      %p72 = scmp.ne.s32.totalorder %s64, %s66
      %p73 = scmp.eq.s32.totalorder %s23, 3
      %p74 = por %p72, %p73
      %p75 = scmp.ne.s32.totalorder %s66, %s67
      %p76 = scmp.eq.s32.totalorder %s23, 0
      %p77 = por %p75, %p76
      %p78 = scmp.ne.s32.totalorder %s66, %s67
      %p79 = scmp.eq.s32.totalorder %s24, 3
      %p80 = por %p78, %p79
      %p82 = scmp.ne.s32.totalorder %s67, %s81
      %p83 = scmp.eq.s32.totalorder %s24, 0
      %p84 = por %p82, %p83
      %s86 = sadd.s32 %s85, 1
      %p89 = scmp.eq.s32.totalorder %s18, 3
      %p90 = scmp.ne.s32.totalorder %s85, %s87
      %p91 = scmp.eq.s32.totalorder %s18, 0
      %p92 = por %p90, %p91
      %p93 = scmp.ne.s32.totalorder %s85, %s87
      %p94 = scmp.eq.s32.totalorder %s23, 3
      %p95 = por %p93, %p94
      %p96 = scmp.ne.s32.totalorder %s87, %s88
      %p97 = scmp.eq.s32.totalorder %s23, 0
      %p98 = por %p96, %p97
      %p99 = scmp.ne.s32.totalorder %s87, %s88
      %p100 = scmp.eq.s32.totalorder %s24, 3
      %p101 = por %p99, %p100
      %p103 = scmp.ne.s32.totalorder %s88, %s102
      %p104 = scmp.eq.s32.totalorder %s24, 0
      %p105 = por %p103, %p104
      %s107 = sadd.s32 %s106, 1
      %p110 = scmp.eq.s32.totalorder %s18, 3
      %p111 = scmp.ne.s32.totalorder %s106, %s108
      %p112 = scmp.eq.s32.totalorder %s18, 0
      %p113 = por %p111, %p112
      %p114 = scmp.ne.s32.totalorder %s106, %s108
      %p115 = scmp.eq.s32.totalorder %s23, 3
      %p116 = por %p114, %p115
      %p117 = scmp.ne.s32.totalorder %s108, %s109
      %p118 = scmp.eq.s32.totalorder %s23, 0
      %p119 = por %p117, %p118
      %p120 = scmp.ne.s32.totalorder %s108, %s109
      %p121 = scmp.eq.s32.totalorder %s24, 3
      %p122 = por %p120, %p121
      %p124 = scmp.ne.s32.totalorder %s109, %s123
      %p125 = scmp.eq.s32.totalorder %s24, 0
      %p126 = por %p124, %p125
      %s128 = sadd.s32 %s127, 1
      %p131 = scmp.eq.s32.totalorder %s18, 3
      %p132 = scmp.ne.s32.totalorder %s127, %s129
      %p133 = scmp.eq.s32.totalorder %s18, 0
      %p134 = por %p132, %p133
      %p135 = scmp.ne.s32.totalorder %s127, %s129
      %p136 = scmp.eq.s32.totalorder %s23, 3
      %p137 = por %p135, %p136
      %p138 = scmp.ne.s32.totalorder %s129, %s130
      %p139 = scmp.eq.s32.totalorder %s23, 0
      %p140 = por %p138, %p139
      %p141 = scmp.ne.s32.totalorder %s129, %s130
      %p142 = scmp.eq.s32.totalorder %s24, 3
      %p143 = por %p141, %p142
      %p145 = scmp.ne.s32.totalorder %s130, %s144
      %p146 = scmp.eq.s32.totalorder %s24, 0
      %p147 = por %p145, %p146
      %s148 = ssub.s32 %s25, %s37
      %s149 = ssub.s32 %s26, %s33
      %s150 = sor.u32 %s148, %s149
      %p151 = scmp.eq.s32.totalorder %s150, 0
      %s153 = sadd.s32 %s152, 1
      %s154 = scalar_select %p151, %s152, %s153
      %p157 = pneg %p151
      %p158 = scmp.eq.s32.totalorder %s18, 3
      %p159 = por %p157, %p158
      %p160 = scmp.ne.s32.totalorder %s152, %s155
      %p161 = scmp.eq.s32.totalorder %s18, 0
      %p162 = por %p160, %p161
      %p163 = scmp.ne.s32.totalorder %s152, %s155
      %p164 = scmp.eq.s32.totalorder %s23, 3
      %p165 = por %p163, %p164
      %p166 = scmp.ne.s32.totalorder %s155, %s156
      %p167 = scmp.eq.s32.totalorder %s23, 0
      %p168 = por %p166, %p167
      %p169 = scmp.ne.s32.totalorder %s155, %s156
      %p170 = scmp.eq.s32.totalorder %s24, 3
      %p171 = por %p169, %p170
      %p173 = scmp.ne.s32.totalorder %s156, %s172
      %p174 = scmp.eq.s32.totalorder %s24, 0
      %p175 = por %p173, %p174
      %p176 = scmp.le.s32.totalorder 1, %s18
      %p177 = scmp.lt.s32.totalorder %s18, 5
      %p178 = pnand %p176, %p177
      %p179 = pneg %p178
      // Predicated region
      $region9: #{tpu_custom_call.1} parent=5 // pred_check
        _
      $region10: #{tpu_custom_call.1} parent=5 // pred_check_branch
        %181 = sbr.rel (%p178) target = $region12
      $region11: #{tpu_custom_call.1} parent=5 // pred_region
        %s182 = ssub.s32 %s18, 1
        // Predicated region
        $region13: #{tpu_custom_call.1} parent=11 // pred_check
          %p183 = pneg %p77
        $region14: #{tpu_custom_call.1} parent=11 // pred_check_branch
          %185 = sbr.rel (%p183) target = $region16
        $region15: #{tpu_custom_call.1} parent=11 // pred_region
          %s187 = ssub.s32 6144, 6144
          %188 = vsyncadd [#allocation9], %s187
          %s189 = sshll.u32 [#allocation8], 4
          %s190 = int_to_ptr.vmem [resolvable:$true] %s189
          %195 = dma.hbm_to_vmem [thread:$0]  %s1, 6144, %s190, [#allocation9], 384, 384, 24
        $region16: #{tpu_custom_call.1} parent=11 // pred_fallthru
          _
        // Predicated region
        $region17: #{tpu_custom_call.1} parent=11 // pred_check
          %p196 = pneg %p98
        $region18: #{tpu_custom_call.1} parent=11 // pred_check_branch
          %198 = sbr.rel (%p196) target = $region20
        $region19: #{tpu_custom_call.1} parent=11 // pred_region
          _
        $region20: #{tpu_custom_call.1} parent=11 // pred_fallthru
          _
        // Predicated region
        $region21: #{tpu_custom_call.1} parent=11 // pred_check
          %p199 = pneg %p119
        $region22: #{tpu_custom_call.1} parent=11 // pred_check_branch
          %201 = sbr.rel (%p199) target = $region24
        $region23: #{tpu_custom_call.1} parent=11 // pred_region
          %s203 = ssub.s32 2048, 2048
          %204 = vsyncadd [#allocation9], %s203
          %s205 = sshll.u32 [#allocation10], 4
          %s206 = int_to_ptr.vmem [resolvable:$true] %s205
          %211 = dma.hbm_to_vmem [thread:$0]  %s3, 2048, %s206, [#allocation9], 128, 128, 8
        $region24: #{tpu_custom_call.1} parent=11 // pred_fallthru
          _
        // Predicated region
        $region25: #{tpu_custom_call.1} parent=11 // pred_check
          %p212 = pneg %p140
        $region26: #{tpu_custom_call.1} parent=11 // pred_check_branch
          %214 = sbr.rel (%p212) target = $region28
        $region27: #{tpu_custom_call.1} parent=11 // pred_region
          _
        $region28: #{tpu_custom_call.1} parent=11 // pred_fallthru
          _
      $region12: #{tpu_custom_call.1} parent=5 // pred_fallthru
        _
      %p215 = scmp.lt.s32.totalorder %s18, 4
      // Predicated region
      $region29: #{tpu_custom_call.1} parent=5 // pred_check
        %p216 = pneg %p215
      $region30: #{tpu_custom_call.1} parent=5 // pred_check_branch
        %218 = sbr.rel (%p216) target = $region32
      $region31: #{tpu_custom_call.1} parent=5 // pred_region
        // Predicated region
        $region33: #{tpu_custom_call.1} parent=31 // pred_check
          %p219 = pneg %p50
        $region34: #{tpu_custom_call.1} parent=31 // pred_check_branch
          %221 = sbr.rel (%p219) target = $region36
        $region35: #{tpu_custom_call.1} parent=31 // pred_region
          %s222 = sand.u32 %s40, 1
          %s223 = scalar_lea.sflag [#allocation6], %s222
          %s224 = sand.u32 %s40, 1
          %s225 = smul.addr %s224, 64
          %s226 = scalar_lea.vmem [#allocation5], %s225
          %s228 = ssub.s32 1024, 1024
          %229 = vsyncadd %s223, %s228
          %s230 = smul.addr %s25, 8
          %s231 = smul.addr %s230, 128
          %s232 = scalar_lea.hbm %s0, %s231
          %s233 = sshll.u32 %s226, 4
          %s234 = int_to_ptr.vmem [resolvable:$true] %s233
          %239 = dma.hbm_to_vmem [thread:$0]  %s232, 1024, %s234, %s223, 128, 128, 8
        $region36: #{tpu_custom_call.1} parent=31 // pred_fallthru
          _
      $region32: #{tpu_custom_call.1} parent=5 // pred_fallthru
        _
      %p240 = scmp.le.s32.totalorder 1, %s18
      %p241 = scmp.lt.s32.totalorder %s18, 5
      %p242 = pnand %p240, %p241
      %p243 = pneg %p242
      // Predicated region
      $region37: #{tpu_custom_call.1} parent=5 // pred_check
        _
      $region38: #{tpu_custom_call.1} parent=5 // pred_check_branch
        %245 = sbr.rel (%p242) target = $region40
      $region39: #{tpu_custom_call.1} parent=5 // pred_region
        %s246 = ssub.s32 %s18, 1
        %s247 = sand.u32 %s43, 1
        %s248 = scalar_lea.sflag [#allocation6], %s247
        %s249 = sand.u32 %s43, 1
        %s250 = smul.addr %s249, 64
        %s251 = scalar_lea.vmem [#allocation5], %s250
        // Predicated region
        $region41: #{tpu_custom_call.1} parent=39 // pred_check
          %p252 = pneg %p56
        $region42: #{tpu_custom_call.1} parent=39 // pred_check_branch
          %254 = sbr.rel (%p252) target = $region44
        $region43: #{tpu_custom_call.1} parent=39 // pred_region
          %255 = dma.done %s248, 1024
        $region44: #{tpu_custom_call.1} parent=39 // pred_fallthru
          _
        // Predicated region
        $region45: #{tpu_custom_call.1} parent=39 // pred_check
          %p256 = pneg %p77
        $region46: #{tpu_custom_call.1} parent=39 // pred_check_branch
          %258 = sbr.rel (%p256) target = $region48
        $region47: #{tpu_custom_call.1} parent=39 // pred_region
          %259 = dma.done [#allocation9], 6144
        $region48: #{tpu_custom_call.1} parent=39 // pred_fallthru
          _
        // Predicated region
        $region49: #{tpu_custom_call.1} parent=39 // pred_check
          %p260 = pneg %p119
        $region50: #{tpu_custom_call.1} parent=39 // pred_check_branch
          %262 = sbr.rel (%p260) target = $region52
        $region51: #{tpu_custom_call.1} parent=39 // pred_region
          %263 = dma.done [#allocation9], 2048
        $region52: #{tpu_custom_call.1} parent=39 // pred_fallthru
          _
        %s264 = sand.u32 %s43, 1
        %s265 = scalar_lea.sflag [#allocation6], %s264
        %s266 = sand.u32 %s43, 1
        %s267 = smul.addr %s266, 64
        %s268 = scalar_lea.vmem [#allocation5], %s267
        %p269 = pneg %p56
        %p270 = pneg %p53
        %p271 = pneg %p77
        %p272 = pneg %p74
        %p273 = pneg %p98
        %p274 = pneg %p95
        %p275 = pneg %p119
        %p276 = pneg %p116
        %p277 = pneg %p140
        %p278 = pneg %p137
        %p279 = pneg %p168
        %p280 = pneg %p165
        %s281 = sand.u32 %s155, 1
        %s282 = scalar_lea.sflag [#allocation7], %s281
        %s283 = sand.u32 %s155, 1
        %s284 = smul.addr %s283, 32
        %s285 = scalar_lea.vmem [#allocation11], %s284
        %s286 = smul.u32 4, %s28
        %p287 = scmp.eq.s32.totalorder %s28, 0
        // Predicated region
        $region53: #{tpu_custom_call.1} parent=39 // pred_check
          %p288 = pneg %p287
        $region54: #{tpu_custom_call.1} parent=39 // pred_check_branch
          %290 = sbr.rel (%p288) target = $region56
        $region55: #{tpu_custom_call.1} parent=39 // pred_region
          %v291 = vld [vmem:[%s251] sm:$0xff]
          %v292 = vld [vmem:[%s251 + $0x8] sm:$0xff]
          %v293 = vld [vmem:[%s251 + $0x10] sm:$0xff]
          %v294 = vld [vmem:[%s251 + $0x18] sm:$0xff]
          %v295 = vld [vmem:[%s251 + $0x20] sm:$0xff]
          %v296 = vld [vmem:[%s251 + $0x28] sm:$0xff]
          %v297 = vld [vmem:[%s251 + $0x30] sm:$0xff]
          %v298 = vld [vmem:[%s251 + $0x38] sm:$0xff]
          %v299 = vld [vmem:[#allocation8] sm:$0xff]
          %v300 = vld [vmem:[#allocation8 + $0x8] sm:$0xff]
          %v301 = vld [vmem:[#allocation8 + $0x10] sm:$0xff]
          %v302 = vld [vmem:[#allocation8 + $0x18] sm:$0xff]
          %v303 = vld [vmem:[#allocation8 + $0x20] sm:$0xff]
          %v304 = vld [vmem:[#allocation8 + $0x28] sm:$0xff]
          %v305 = vld [vmem:[#allocation8 + $0x30] sm:$0xff]
          %v306 = vld [vmem:[#allocation8 + $0x38] sm:$0xff]
          %v307 = vld [vmem:[#allocation8 + $0x40] sm:$0xff]
          %v308 = vld [vmem:[#allocation8 + $0x48] sm:$0xff]
          %v309 = vld [vmem:[#allocation8 + $0x50] sm:$0xff]
          %v310 = vld [vmem:[#allocation8 + $0x58] sm:$0xff]
          %v311 = vld [vmem:[#allocation8 + $0x60] sm:$0xff]
          %v312 = vld [vmem:[#allocation8 + $0x68] sm:$0xff]
          %v313 = vld [vmem:[#allocation8 + $0x70] sm:$0xff]
          %v314 = vld [vmem:[#allocation8 + $0x78] sm:$0xff]
          %v315 = vld [vmem:[#allocation8 + $0x80] sm:$0xff]
          %v316 = vld [vmem:[#allocation8 + $0x88] sm:$0xff]
          %v317 = vld [vmem:[#allocation8 + $0x90] sm:$0xff]
          %v318 = vld [vmem:[#allocation8 + $0x98] sm:$0xff]
          %v319 = vld [vmem:[#allocation8 + $0xa0] sm:$0xff]
          %v320 = vld [vmem:[#allocation8 + $0xa8] sm:$0xff]
          %v321 = vld [vmem:[#allocation8 + $0xb0] sm:$0xff]
          %v322 = vld [vmem:[#allocation8 + $0xb8] sm:$0xff]
          %v323 = vld [vmem:[#allocation8 + $0xc0] sm:$0xff]
          %v324 = vld [vmem:[#allocation8 + $0xc8] sm:$0xff]
          %v325 = vld [vmem:[#allocation8 + $0xd0] sm:$0xff]
          %v326 = vld [vmem:[#allocation8 + $0xd8] sm:$0xff]
          %v327 = vld [vmem:[#allocation8 + $0xe0] sm:$0xff]
          %v328 = vld [vmem:[#allocation8 + $0xe8] sm:$0xff]
          %v329 = vld [vmem:[#allocation8 + $0xf0] sm:$0xff]
          %v330 = vld [vmem:[#allocation8 + $0xf8] sm:$0xff]
          %v331 = vld [vmem:[#allocation8 + $0x100] sm:$0xff]
          %v332 = vld [vmem:[#allocation8 + $0x108] sm:$0xff]
          %v333 = vld [vmem:[#allocation8 + $0x110] sm:$0xff]
          %v334 = vld [vmem:[#allocation8 + $0x118] sm:$0xff]
          %v335 = vld [vmem:[#allocation8 + $0x120] sm:$0xff]
          %v336 = vld [vmem:[#allocation8 + $0x128] sm:$0xff]
          %v337 = vld [vmem:[#allocation8 + $0x130] sm:$0xff]
          %v338 = vld [vmem:[#allocation8 + $0x138] sm:$0xff]
          %v339 = vld [vmem:[#allocation8 + $0x140] sm:$0xff]
          %v340 = vld [vmem:[#allocation8 + $0x148] sm:$0xff]
          %v341 = vld [vmem:[#allocation8 + $0x150] sm:$0xff]
          %v342 = vld [vmem:[#allocation8 + $0x158] sm:$0xff]
          %v343 = vld [vmem:[#allocation8 + $0x160] sm:$0xff]
          %v344 = vld [vmem:[#allocation8 + $0x168] sm:$0xff]
          %v345 = vld [vmem:[#allocation8 + $0x170] sm:$0xff]
          %v346 = vld [vmem:[#allocation8 + $0x178] sm:$0xff]
          %v347 = vld [vmem:[%s2] sm:$0x7]
          %v349 = vlaneseq
          %v350 = vshrl.u32 %v349, 7
          %v351 = vsub.s32 0, %v350
          %v352 = vrot.slane %v347, %v351
          %v353 = vlaneseq
          %v354 = vshrl.u32 %v353, 7
          %v355 = vsub.s32 1, %v354
          %v356 = vrot.slane %v347, %v355
          %v357 = vlaneseq
          %v358 = vshrl.u32 %v357, 7
          %v359 = vsub.s32 2, %v358
          %v360 = vrot.slane %v347, %v359
          %364 = vmatprep.subr.mxu0 %v300
          %365 = vmatpush1.msra.mxu0 %v299
          %366 = vmatprep.subr.mxu0 %v303
          %367 = vmatpush1.msra.mxu0 %v302
          %368 = vmatprep.subr.mxu0 %v306
          %369 = vmatpush1.msra.mxu0 %v305
          %370 = vmatprep.subr.mxu0 %v309
          %371 = vmatpush1.msra.mxu0 %v308
          %372 = vmatprep.subr.mxu0 %v312
          %373 = vmatpush1.msra.mxu0 %v311
          %374 = vmatprep.subr.mxu0 %v315
          %375 = vmatpush1.msra.mxu0 %v314
          %376 = vmatprep.subr.mxu0 %v318
          %377 = vmatpush1.msra.mxu0 %v317
          %378 = vmatprep.subr.mxu0 %v321
          %379 = vmatpush1.msra.mxu0 %v320
          %380 = vmatprep.subr.mxu0 %v324
          %381 = vmatpush1.msra.mxu0 %v323
          %382 = vmatprep.subr.mxu0 %v327
          %383 = vmatpush1.msra.mxu0 %v326
          %384 = vmatprep.subr.mxu0 %v330
          %385 = vmatpush1.msra.mxu0 %v329
          %386 = vmatprep.subr.mxu0 %v333
          %387 = vmatpush1.msra.mxu0 %v332
          %388 = vmatprep.subr.mxu0 %v336
          %389 = vmatpush1.msra.mxu0 %v335
          %390 = vmatprep.subr.mxu0 %v339
          %391 = vmatpush1.msra.mxu0 %v338
          %392 = vmatprep.subr.mxu0 %v342
          %393 = vmatpush1.msra.mxu0 %v341
          %394 = vmatprep.subr.mxu0 %v345
          %395 = vmatpush1.msra.mxu0 %v344
          %396 = vmatprep.subr.mxu0 0.0
          %397 = vmatpush1.msra.mxu0 0.0
          %398 = vmatprep.subr.mxu0 0.0
          %399 = vmatpush1.msra.mxu0 0.0
          %400 = vmatprep.subr.mxu0 0.0
          %401 = vmatpush1.msra.mxu0 0.0
          %402 = vmatprep.subr.mxu0 0.0
          %403 = vmatpush1.msra.mxu0 0.0
          %404 = vmatprep.subr.mxu0 0.0
          %405 = vmatpush1.msra.mxu0 0.0
          %406 = vmatprep.subr.mxu0 0.0
          %407 = vmatpush1.msra.mxu0 0.0
          %408 = vmatprep.subr.mxu0 0.0
          %409 = vmatpush1.msra.mxu0 0.0
          %410 = vmatprep.subr.mxu0 0.0
          %411 = vmatpush1.msra.mxu0 0.0
          %412 = vmatprep.subr.mxu0 0.0
          %413 = vmatpush1.msra.mxu0 0.0
          %414 = vmatprep.subr.mxu0 0.0
          %415 = vmatpush1.msra.mxu0 0.0
          %416 = vmatprep.subr.mxu0 0.0
          %417 = vmatpush1.msra.mxu0 0.0
          %418 = vmatprep.subr.mxu0 0.0
          %419 = vmatpush1.msra.mxu0 0.0
          %420 = vmatprep.subr.mxu0 0.0
          %421 = vmatpush1.msra.mxu0 0.0
          %422 = vmatprep.subr.mxu0 0.0
          %423 = vmatpush1.msra.mxu0 0.0
          %424 = vmatprep.subr.mxu0 0.0
          %425 = vmatpush1.msra.mxu0 0.0
          %426 = vmatprep.subr.mxu0 0.0
          %427 = vmatpush1.msra.mxu0 0.0
          %428 = vmatprep.mubr.f32.mxu0 0.0
          %429 = vmatmul.mubr.f32.gmra.mrb[0].mxu0 %v291
          %v430 = vpop.f32.mrb[0].mxu0
          %v431 = vadd.f32 %v352, %v430
          %v432 = vpop.f32.mrb[0].mxu0
          %v433 = vadd.f32 %v356, %v432
          %434 = vmatprep.mubr.f32.mxu0 0.0
          %435 = vmatmul.mubr.f32.gmra.mrb[0].mxu0 %v292
          %v436 = vpop.f32.mrb[0].mxu0
          %v437 = vadd.f32 %v352, %v436
          %v438 = vpop.f32.mrb[0].mxu0
          %v439 = vadd.f32 %v356, %v438
          %440 = vmatprep.mubr.f32.mxu0 0.0
          %441 = vmatmul.mubr.f32.gmra.mrb[0].mxu0 %v293
          %v442 = vpop.f32.mrb[0].mxu0
          %v443 = vadd.f32 %v352, %v442
          %v444 = vpop.f32.mrb[0].mxu0
          %v445 = vadd.f32 %v356, %v444
          %446 = vmatprep.mubr.f32.mxu0 0.0
          %447 = vmatmul.mubr.f32.gmra.mrb[0].mxu0 %v294
          %v448 = vpop.f32.mrb[0].mxu0
          %v449 = vadd.f32 %v352, %v448
          %v450 = vpop.f32.mrb[0].mxu0
          %v451 = vadd.f32 %v356, %v450
          %452 = vmatprep.mubr.f32.mxu0 0.0
          %453 = vmatmul.mubr.f32.gmra.mrb[0].mxu0 %v295
          %v454 = vpop.f32.mrb[0].mxu0
          %v455 = vadd.f32 %v352, %v454
          %v456 = vpop.f32.mrb[0].mxu0
          %v457 = vadd.f32 %v356, %v456
          %458 = vmatprep.mubr.f32.mxu0 0.0
          %459 = vmatmul.mubr.f32.gmra.mrb[0].mxu0 %v296
          %v460 = vpop.f32.mrb[0].mxu0
          %v461 = vadd.f32 %v352, %v460
          %v462 = vpop.f32.mrb[0].mxu0
          %v463 = vadd.f32 %v356, %v462
          %464 = vmatprep.mubr.f32.mxu0 0.0
          %465 = vmatmul.mubr.f32.gmra.mrb[0].mxu0 %v297
          %v466 = vpop.f32.mrb[0].mxu0
          %v467 = vadd.f32 %v352, %v466
          %v468 = vpop.f32.mrb[0].mxu0
          %v469 = vadd.f32 %v356, %v468
          %470 = vmatprep.mubr.f32.mxu0 0.0
          %471 = vmatmul.mubr.f32.gmra.mrb[0].mxu0 %v298
          %v472 = vpop.f32.mrb[0].mxu0
          %v473 = vadd.f32 %v352, %v472
          %v474 = vpop.f32.mrb[0].mxu0
          %v475 = vadd.f32 %v356, %v474
          %476 = vdwg.mxu0
          %477 = vmatprep.subr.mxu0 0.0
          %478 = vmatpush1.msra.mxu0 %v301
          %479 = vmatprep.subr.mxu0 0.0
          %480 = vmatpush1.msra.mxu0 %v304
          %481 = vmatprep.subr.mxu0 0.0
          %482 = vmatpush1.msra.mxu0 %v307
          %483 = vmatprep.subr.mxu0 0.0
          %484 = vmatpush1.msra.mxu0 %v310
          %485 = vmatprep.subr.mxu0 0.0
          %486 = vmatpush1.msra.mxu0 %v313
          %487 = vmatprep.subr.mxu0 0.0
          %488 = vmatpush1.msra.mxu0 %v316
          %489 = vmatprep.subr.mxu0 0.0
          %490 = vmatpush1.msra.mxu0 %v319
          %491 = vmatprep.subr.mxu0 0.0
          %492 = vmatpush1.msra.mxu0 %v322
          %493 = vmatprep.subr.mxu0 0.0
          %494 = vmatpush1.msra.mxu0 %v325
          %495 = vmatprep.subr.mxu0 0.0
          %496 = vmatpush1.msra.mxu0 %v328
          %497 = vmatprep.subr.mxu0 0.0
          %498 = vmatpush1.msra.mxu0 %v331
          %499 = vmatprep.subr.mxu0 0.0
          %500 = vmatpush1.msra.mxu0 %v334
          %501 = vmatprep.subr.mxu0 0.0
          %502 = vmatpush1.msra.mxu0 %v337
          %503 = vmatprep.subr.mxu0 0.0
          %504 = vmatpush1.msra.mxu0 %v340
          %505 = vmatprep.subr.mxu0 0.0
          %506 = vmatpush1.msra.mxu0 %v343
          %507 = vmatprep.subr.mxu0 0.0
          %508 = vmatpush1.msra.mxu0 %v346
          %509 = vmatprep.subr.mxu0 0.0
          %510 = vmatpush1.msra.mxu0 0.0
          %511 = vmatprep.subr.mxu0 0.0
          %512 = vmatpush1.msra.mxu0 0.0
          %513 = vmatprep.subr.mxu0 0.0
          %514 = vmatpush1.msra.mxu0 0.0
          %515 = vmatprep.subr.mxu0 0.0
          %516 = vmatpush1.msra.mxu0 0.0
          %517 = vmatprep.subr.mxu0 0.0
          %518 = vmatpush1.msra.mxu0 0.0
          %519 = vmatprep.subr.mxu0 0.0
          %520 = vmatpush1.msra.mxu0 0.0
          %521 = vmatprep.subr.mxu0 0.0
          %522 = vmatpush1.msra.mxu0 0.0
          %523 = vmatprep.subr.mxu0 0.0
          %524 = vmatpush1.msra.mxu0 0.0
          %525 = vmatprep.subr.mxu0 0.0
          %526 = vmatpush1.msra.mxu0 0.0
          %527 = vmatprep.subr.mxu0 0.0
          %528 = vmatpush1.msra.mxu0 0.0
          %529 = vmatprep.subr.mxu0 0.0
          %530 = vmatpush1.msra.mxu0 0.0
          %531 = vmatprep.subr.mxu0 0.0
          %532 = vmatpush1.msra.mxu0 0.0
          %533 = vmatprep.subr.mxu0 0.0
          %534 = vmatpush1.msra.mxu0 0.0
          %535 = vmatprep.subr.mxu0 0.0
          %536 = vmatpush1.msra.mxu0 0.0
          %537 = vmatprep.subr.mxu0 0.0
          %538 = vmatpush1.msra.mxu0 0.0
          %539 = vmatprep.subr.mxu0 0.0
          %540 = vmatpush1.msra.mxu0 0.0
          %541 = vmatprep.mubr.f32.mxu0 0.0
          %542 = vmatmul.mubr.f32.gmra.mrb[0].mxu0 %v291
          %v543 = vpop.f32.mrb[0].mxu0
          %v544 = vadd.f32 %v360, %v543
          %v545 = vpop.f32.mrb[0].mxu0
          %546 = vmatprep.mubr.f32.mxu0 0.0
          %547 = vmatmul.mubr.f32.gmra.mrb[0].mxu0 %v292
          %v548 = vpop.f32.mrb[0].mxu0
          %v549 = vadd.f32 %v360, %v548
          %v550 = vpop.f32.mrb[0].mxu0
          %551 = vmatprep.mubr.f32.mxu0 0.0
          %552 = vmatmul.mubr.f32.gmra.mrb[0].mxu0 %v293
          %v553 = vpop.f32.mrb[0].mxu0
          %v554 = vadd.f32 %v360, %v553
          %v555 = vpop.f32.mrb[0].mxu0
          %556 = vmatprep.mubr.f32.mxu0 0.0
          %557 = vmatmul.mubr.f32.gmra.mrb[0].mxu0 %v294
          %v558 = vpop.f32.mrb[0].mxu0
          %v559 = vadd.f32 %v360, %v558
          %v560 = vpop.f32.mrb[0].mxu0
          %561 = vmatprep.mubr.f32.mxu0 0.0
          %562 = vmatmul.mubr.f32.gmra.mrb[0].mxu0 %v295
          %v563 = vpop.f32.mrb[0].mxu0
          %v564 = vadd.f32 %v360, %v563
          %v565 = vpop.f32.mrb[0].mxu0
          %566 = vmatprep.mubr.f32.mxu0 0.0
          %567 = vmatmul.mubr.f32.gmra.mrb[0].mxu0 %v296
          %v568 = vpop.f32.mrb[0].mxu0
          %v569 = vadd.f32 %v360, %v568
          %v570 = vpop.f32.mrb[0].mxu0
          %571 = vmatprep.mubr.f32.mxu0 0.0
          %572 = vmatmul.mubr.f32.gmra.mrb[0].mxu0 %v297
          %v573 = vpop.f32.mrb[0].mxu0
          %v574 = vadd.f32 %v360, %v573
          %v575 = vpop.f32.mrb[0].mxu0
          %576 = vmatprep.mubr.f32.mxu0 0.0
          %577 = vmatmul.mubr.f32.gmra.mrb[0].mxu0 %v298
          %v578 = vpop.f32.mrb[0].mxu0
          %v579 = vadd.f32 %v360, %v578
          %v580 = vpop.f32.mrb[0].mxu0
          %581 = vdwg.mxu0
          %v582 = vmul.f32 %v431, 0.17677669
          %v583 = vmul.f32 %v437, 0.17677669
          %v584 = vmul.f32 %v443, 0.17677669
          %v585 = vmul.f32 %v449, 0.17677669
          %v586 = vmul.f32 %v455, 0.17677669
          %v587 = vmul.f32 %v461, 0.17677669
          %v588 = vmul.f32 %v467, 0.17677669
          %v589 = vmul.f32 %v473, 0.17677669
          %590 = vst [vmem:[#allocation2] sm:$0xff] %v582
          %591 = vst [vmem:[#allocation2 + $0x8] sm:$0xff] %v583
          %592 = vst [vmem:[#allocation2 + $0x10] sm:$0xff] %v584
          %593 = vst [vmem:[#allocation2 + $0x18] sm:$0xff] %v585
          %594 = vst [vmem:[#allocation2 + $0x20] sm:$0xff] %v586
          %595 = vst [vmem:[#allocation2 + $0x28] sm:$0xff] %v587
          %596 = vst [vmem:[#allocation2 + $0x30] sm:$0xff] %v588
          %597 = vst [vmem:[#allocation2 + $0x38] sm:$0xff] %v589
          %598 = vst [vmem:[#allocation3] sm:$0xff] %v433
          %599 = vst [vmem:[#allocation3 + $0x8] sm:$0xff] %v439
          %600 = vst [vmem:[#allocation3 + $0x10] sm:$0xff] %v445
          %601 = vst [vmem:[#allocation3 + $0x18] sm:$0xff] %v451
          %602 = vst [vmem:[#allocation3 + $0x20] sm:$0xff] %v457
          %603 = vst [vmem:[#allocation3 + $0x28] sm:$0xff] %v463
          %604 = vst [vmem:[#allocation3 + $0x30] sm:$0xff] %v469
          %605 = vst [vmem:[#allocation3 + $0x38] sm:$0xff] %v475
          %606 = vst [vmem:[#allocation4] sm:$0xff] %v544
          %607 = vst [vmem:[#allocation4 + $0x8] sm:$0xff] %v549
          %608 = vst [vmem:[#allocation4 + $0x10] sm:$0xff] %v554
          %609 = vst [vmem:[#allocation4 + $0x18] sm:$0xff] %v559
          %610 = vst [vmem:[#allocation4 + $0x20] sm:$0xff] %v564
          %611 = vst [vmem:[#allocation4 + $0x28] sm:$0xff] %v569
          %612 = vst [vmem:[#allocation4 + $0x30] sm:$0xff] %v574
          %613 = vst [vmem:[#allocation4 + $0x38] sm:$0xff] %v579
        $region56: #{tpu_custom_call.1} parent=39 // pred_fallthru
          _
        %s614 = smul.u32 %s28, 32
        %s615 = scalar_lea.vmem [#allocation2], %s614
        %v616 = vld [vmem:[%s615] sm:$0xff]
        %v617 = vld [vmem:[%s615 + $0x8] sm:$0xff]
        %v618 = vld [vmem:[%s615 + $0x10] sm:$0xff]
        %v619 = vld [vmem:[%s615 + $0x18] sm:$0xff]
        %v620 = vld [vmem:[#allocation3] sm:$0xff]
        %v621 = vld [vmem:[#allocation3 + $0x8] sm:$0xff]
        %v622 = vld [vmem:[#allocation3 + $0x10] sm:$0xff]
        %v623 = vld [vmem:[#allocation3 + $0x18] sm:$0xff]
        %v624 = vld [vmem:[#allocation3 + $0x20] sm:$0xff]
        %v625 = vld [vmem:[#allocation3 + $0x28] sm:$0xff]
        %v626 = vld [vmem:[#allocation3 + $0x30] sm:$0xff]
        %v627 = vld [vmem:[#allocation3 + $0x38] sm:$0xff]
        %v628 = vld [vmem:[#allocation4] sm:$0xff]
        %v629 = vld [vmem:[#allocation4 + $0x8] sm:$0xff]
        %v630 = vld [vmem:[#allocation4 + $0x10] sm:$0xff]
        %v631 = vld [vmem:[#allocation4 + $0x18] sm:$0xff]
        %v632 = vld [vmem:[#allocation4 + $0x20] sm:$0xff]
        %v633 = vld [vmem:[#allocation4 + $0x28] sm:$0xff]
        %v634 = vld [vmem:[#allocation4 + $0x30] sm:$0xff]
        %v635 = vld [vmem:[#allocation4 + $0x38] sm:$0xff]
        %vm636 = vcmask 261120
        %v638 = vsel %vm636, %v616, 0
        %v641 = vsel %vm636, %v617, 0
        %v644 = vsel %vm636, %v618, 0
        %v647 = vsel %vm636, %v619, 0
        %v650 = vsel %vm636, %v620, 0
        %v653 = vsel %vm636, %v621, 0
        %v656 = vsel %vm636, %v622, 0
        %v659 = vsel %vm636, %v623, 0
        %v662 = vsel %vm636, %v624, 0
        %v665 = vsel %vm636, %v625, 0
        %v668 = vsel %vm636, %v626, 0
        %v671 = vsel %vm636, %v627, 0
        %673 = vmatprep.subr.mxu0 0.0
        %674 = vmatpush1.xpose.msra.mxu0 %v650
        %675 = vmatprep.subr.mxu0 0.0
        %676 = vmatpush1.xpose.msra.mxu0 %v653
        %677 = vmatprep.subr.mxu0 0.0
        %678 = vmatpush1.xpose.msra.mxu0 %v656
        %679 = vmatprep.subr.mxu0 0.0
        %680 = vmatpush1.xpose.msra.mxu0 %v659
        %681 = vmatprep.subr.mxu0 0.0
        %682 = vmatpush1.xpose.msra.mxu0 %v662
        %683 = vmatprep.subr.mxu0 0.0
        %684 = vmatpush1.xpose.msra.mxu0 %v665
        %685 = vmatprep.subr.mxu0 0.0
        %686 = vmatpush1.xpose.msra.mxu0 %v668
        %687 = vmatprep.subr.mxu0 0.0
        %688 = vmatpush1.xpose.msra.mxu0 %v671
        %689 = vmatprep.subr.mxu0 0.0
        %690 = vmatpush1.xpose.msra.mxu0 0.0
        %691 = vmatprep.subr.mxu0 0.0
        %692 = vmatpush1.xpose.msra.mxu0 0.0
        %693 = vmatprep.subr.mxu0 0.0
        %694 = vmatpush1.xpose.msra.mxu0 0.0
        %695 = vmatprep.subr.mxu0 0.0
        %696 = vmatpush1.xpose.msra.mxu0 0.0
        %697 = vmatprep.subr.mxu0 0.0
        %698 = vmatpush1.xpose.msra.mxu0 0.0
        %699 = vmatprep.subr.mxu0 0.0
        %700 = vmatpush1.xpose.msra.mxu0 0.0
        %701 = vmatprep.subr.mxu0 0.0
        %702 = vmatpush1.xpose.msra.mxu0 0.0
        %703 = vmatprep.subr.mxu0 0.0
        %704 = vmatpush1.xpose.msra.mxu0 0.0
        %705 = vmatprep.subr.mxu0 0.0
        %706 = vmatpush1.xpose.msra.mxu0 0.0
        %707 = vmatprep.subr.mxu0 0.0
        %708 = vmatpush1.xpose.msra.mxu0 0.0
        %709 = vmatprep.subr.mxu0 0.0
        %710 = vmatpush1.xpose.msra.mxu0 0.0
        %711 = vmatprep.subr.mxu0 0.0
        %712 = vmatpush1.xpose.msra.mxu0 0.0
        %713 = vmatprep.subr.mxu0 0.0
        %714 = vmatpush1.xpose.msra.mxu0 0.0
        %715 = vmatprep.subr.mxu0 0.0
        %716 = vmatpush1.xpose.msra.mxu0 0.0
        %717 = vmatprep.subr.mxu0 0.0
        %718 = vmatpush1.xpose.msra.mxu0 0.0
        %719 = vmatprep.subr.mxu0 0.0
        %720 = vmatpush1.xpose.msra.mxu0 0.0
        %721 = vmatprep.subr.mxu0 0.0
        %722 = vmatpush1.xpose.msra.mxu0 0.0
        %723 = vmatprep.subr.mxu0 0.0
        %724 = vmatpush1.xpose.msra.mxu0 0.0
        %725 = vmatprep.subr.mxu0 0.0
        %726 = vmatpush1.xpose.msra.mxu0 0.0
        %727 = vmatprep.subr.mxu0 0.0
        %728 = vmatpush1.xpose.msra.mxu0 0.0
        %729 = vmatprep.subr.mxu0 0.0
        %730 = vmatpush1.xpose.msra.mxu0 0.0
        %731 = vmatprep.subr.mxu0 0.0
        %732 = vmatpush1.xpose.msra.mxu0 0.0
        %733 = vmatprep.subr.mxu0 0.0
        %734 = vmatpush1.xpose.msra.mxu0 0.0
        %735 = vmatprep.subr.mxu0 0.0
        %736 = vmatpush1.xpose.msra.mxu0 0.0
        %737 = vmatprep.mubr.f32.mxu0 0.0
        %738 = vmatmul.mubr.f32.gmra.mrb[0].mxu0 %v638
        %v739 = vpop.f32.mrb[0].mxu0
        %v740 = vadd.f32 0.0, %v739
        %v741 = vpop.f32.mrb[0].mxu0
        %742 = vmatprep.mubr.f32.mxu0 0.0
        %743 = vmatmul.mubr.f32.gmra.mrb[0].mxu0 %v641
        %v744 = vpop.f32.mrb[0].mxu0
        %v745 = vadd.f32 0.0, %v744
        %v746 = vpop.f32.mrb[0].mxu0
        %747 = vmatprep.mubr.f32.mxu0 0.0
        %748 = vmatmul.mubr.f32.gmra.mrb[0].mxu0 %v644
        %v749 = vpop.f32.mrb[0].mxu0
        %v750 = vadd.f32 0.0, %v749
        %v751 = vpop.f32.mrb[0].mxu0
        %752 = vmatprep.mubr.f32.mxu0 0.0
        %753 = vmatmul.mubr.f32.gmra.mrb[0].mxu0 %v647
        %v754 = vpop.f32.mrb[0].mxu0
        %v755 = vadd.f32 0.0, %v754
        %v756 = vpop.f32.mrb[0].mxu0
        %757 = vdwg.mxu0
        %vm758 = vcmask 523264
        %v759 = vsel %vm758, %v740, -inf
        %760 = vmax.xlane.f32.xlu0 %v759
        %v761 = vpop.xlane.xlu0 %760
        %v762 = vsel %vm758, %v745, -inf
        %763 = vmax.xlane.f32.xlu0 %v762
        %v764 = vpop.xlane.xlu0 %763
        %v765 = vsel %vm758, %v750, -inf
        %766 = vmax.xlane.f32.xlu0 %v765
        %v767 = vpop.xlane.xlu0 %766
        %v768 = vsel %vm758, %v755, -inf
        %769 = vmax.xlane.f32.xlu0 %v768
        %v770 = vpop.xlane.xlu0 %769
        %v771 = vsub.f32 %v740, %v761
        %v772 = vsub.f32 %v745, %v764
        %v773 = vsub.f32 %v750, %v767
        %v774 = vsub.f32 %v755, %v770
        %v775 = vmul.f32 %v771, 1.442695
        %v776 = vpow.pop %v775
        %v777 = vmul.f32 %v772, 1.442695
        %v778 = vpow.pop %v777
        %v779 = vmul.f32 %v773, 1.442695
        %v780 = vpow.pop %v779
        %v781 = vmul.f32 %v774, 1.442695
        %v782 = vpow.pop %v781
        %v783 = vsel %vm758, %v776, 0.0
        %784 = vadd.xlane.f32.xlu0 %v783
        %v785 = vpop.xlane.xlu0 %784
        %v786 = vsel %vm758, %v778, 0.0
        %787 = vadd.xlane.f32.xlu0 %v786
        %v788 = vpop.xlane.xlu0 %787
        %v789 = vsel %vm758, %v780, 0.0
        %790 = vadd.xlane.f32.xlu0 %v789
        %v791 = vpop.xlane.xlu0 %790
        %v792 = vsel %vm758, %v782, 0.0
        %793 = vadd.xlane.f32.xlu0 %v792
        %v794 = vpop.xlane.xlu0 %793
        %v795 = vrcp.pop %v785
        %v796 = vrcp.pop %v788
        %v797 = vrcp.pop %v791
        %v798 = vrcp.pop %v794
        %v799 = vmul.f32 %v785, %v795
        %v800 = vmul.f32 %v788, %v796
        %v801 = vmul.f32 %v791, %v797
        %v802 = vmul.f32 %v794, %v798
        %v803 = vsub.f32 2.0, %v799
        %v804 = vsub.f32 2.0, %v800
        %v805 = vsub.f32 2.0, %v801
        %v806 = vsub.f32 2.0, %v802
        %v807 = vmul.f32 %v795, %v803
        %v808 = vmul.f32 %v796, %v804
        %v809 = vmul.f32 %v797, %v805
        %v810 = vmul.f32 %v798, %v806
        %v812 = vsel %vm758, %v776, 0
        %v815 = vsel %vm758, %v778, 0
        %v818 = vsel %vm758, %v780, 0
        %v821 = vsel %vm758, %v782, 0
        %823 = vmatprep.subr.mxu0 0.0
        %824 = vmatpush1.msra.mxu0 %v628
        %825 = vmatprep.subr.mxu0 0.0
        %826 = vmatpush1.msra.mxu0 %v629
        %827 = vmatprep.subr.mxu0 0.0
        %828 = vmatpush1.msra.mxu0 %v630
        %829 = vmatprep.subr.mxu0 0.0
        %830 = vmatpush1.msra.mxu0 %v631
        %831 = vmatprep.subr.mxu0 0.0
        %832 = vmatpush1.msra.mxu0 %v632
        %833 = vmatprep.subr.mxu0 0.0
        %834 = vmatpush1.msra.mxu0 %v633
        %835 = vmatprep.subr.mxu0 0.0
        %836 = vmatpush1.msra.mxu0 %v634
        %837 = vmatprep.subr.mxu0 0.0
        %838 = vmatpush1.msra.mxu0 %v635
        %839 = vmatprep.subr.mxu0 0.0
        %840 = vmatpush1.msra.mxu0 0.0
        %841 = vmatprep.subr.mxu0 0.0
        %842 = vmatpush1.msra.mxu0 0.0
        %843 = vmatprep.subr.mxu0 0.0
        %844 = vmatpush1.msra.mxu0 0.0
        %845 = vmatprep.subr.mxu0 0.0
        %846 = vmatpush1.msra.mxu0 0.0
        %847 = vmatprep.subr.mxu0 0.0
        %848 = vmatpush1.msra.mxu0 0.0
        %849 = vmatprep.subr.mxu0 0.0
        %850 = vmatpush1.msra.mxu0 0.0
        %851 = vmatprep.subr.mxu0 0.0
        %852 = vmatpush1.msra.mxu0 0.0
        %853 = vmatprep.subr.mxu0 0.0
        %854 = vmatpush1.msra.mxu0 0.0
        %855 = vmatprep.subr.mxu0 0.0
        %856 = vmatpush1.msra.mxu0 0.0
        %857 = vmatprep.subr.mxu0 0.0
        %858 = vmatpush1.msra.mxu0 0.0
        %859 = vmatprep.subr.mxu0 0.0
        %860 = vmatpush1.msra.mxu0 0.0
        %861 = vmatprep.subr.mxu0 0.0
        %862 = vmatpush1.msra.mxu0 0.0
        %863 = vmatprep.subr.mxu0 0.0
        %864 = vmatpush1.msra.mxu0 0.0
        %865 = vmatprep.subr.mxu0 0.0
        %866 = vmatpush1.msra.mxu0 0.0
        %867 = vmatprep.subr.mxu0 0.0
        %868 = vmatpush1.msra.mxu0 0.0
        %869 = vmatprep.subr.mxu0 0.0
        %870 = vmatpush1.msra.mxu0 0.0
        %871 = vmatprep.subr.mxu0 0.0
        %872 = vmatpush1.msra.mxu0 0.0
        %873 = vmatprep.subr.mxu0 0.0
        %874 = vmatpush1.msra.mxu0 0.0
        %875 = vmatprep.subr.mxu0 0.0
        %876 = vmatpush1.msra.mxu0 0.0
        %877 = vmatprep.subr.mxu0 0.0
        %878 = vmatpush1.msra.mxu0 0.0
        %879 = vmatprep.subr.mxu0 0.0
        %880 = vmatpush1.msra.mxu0 0.0
        %881 = vmatprep.subr.mxu0 0.0
        %882 = vmatpush1.msra.mxu0 0.0
        %883 = vmatprep.subr.mxu0 0.0
        %884 = vmatpush1.msra.mxu0 0.0
        %885 = vmatprep.subr.mxu0 0.0
        %886 = vmatpush1.msra.mxu0 0.0
        %887 = vmatprep.mubr.f32.mxu0 0.0
        %888 = vmatmul.mubr.f32.gmra.mrb[0].mxu0 %v812
        %v889 = vpop.f32.mrb[0].mxu0
        %v890 = vadd.f32 0.0, %v889
        %v891 = vpop.f32.mrb[0].mxu0
        %892 = vmatprep.mubr.f32.mxu0 0.0
        %893 = vmatmul.mubr.f32.gmra.mrb[0].mxu0 %v815
        %v894 = vpop.f32.mrb[0].mxu0
        %v895 = vadd.f32 0.0, %v894
        %v896 = vpop.f32.mrb[0].mxu0
        %897 = vmatprep.mubr.f32.mxu0 0.0
        %898 = vmatmul.mubr.f32.gmra.mrb[0].mxu0 %v818
        %v899 = vpop.f32.mrb[0].mxu0
        %v900 = vadd.f32 0.0, %v899
        %v901 = vpop.f32.mrb[0].mxu0
        %902 = vmatprep.mubr.f32.mxu0 0.0
        %903 = vmatmul.mubr.f32.gmra.mrb[0].mxu0 %v821
        %v904 = vpop.f32.mrb[0].mxu0
        %v905 = vadd.f32 0.0, %v904
        %v906 = vpop.f32.mrb[0].mxu0
        %907 = vdwg.mxu0
        %v908 = vmul.f32 %v890, %v807
        %v909 = vmul.f32 %v895, %v808
        %v910 = vmul.f32 %v900, %v809
        %v911 = vmul.f32 %v905, %v810
        %912 = vrot.lane.b32.xlu0 %v616, 96
        %v913 = vpop.permute.xlu0 %912
        %914 = vrot.lane.b32.xlu0 %v617, 96
        %v915 = vpop.permute.xlu0 %914
        %916 = vrot.lane.b32.xlu0 %v618, 96
        %v917 = vpop.permute.xlu0 %916
        %918 = vrot.lane.b32.xlu0 %v619, 96
        %v919 = vpop.permute.xlu0 %918
        %920 = vrot.lane.b32.xlu0 %v620, 96
        %v921 = vpop.permute.xlu0 %920
        %922 = vrot.lane.b32.xlu0 %v621, 96
        %v923 = vpop.permute.xlu0 %922
        %924 = vrot.lane.b32.xlu0 %v622, 96
        %v925 = vpop.permute.xlu0 %924
        %926 = vrot.lane.b32.xlu0 %v623, 96
        %v927 = vpop.permute.xlu0 %926
        %928 = vrot.lane.b32.xlu0 %v624, 96
        %v929 = vpop.permute.xlu0 %928
        %930 = vrot.lane.b32.xlu0 %v625, 96
        %v931 = vpop.permute.xlu0 %930
        %932 = vrot.lane.b32.xlu0 %v626, 96
        %v933 = vpop.permute.xlu0 %932
        %934 = vrot.lane.b32.xlu0 %v627, 96
        %v935 = vpop.permute.xlu0 %934
        %v936 = vsel %vm636, %v913, 0
        %v938 = vsel %vm636, %v915, 0
        %v940 = vsel %vm636, %v917, 0
        %v942 = vsel %vm636, %v919, 0
        %v944 = vsel %vm636, %v921, 0
        %v946 = vsel %vm636, %v923, 0
        %v948 = vsel %vm636, %v925, 0
        %v950 = vsel %vm636, %v927, 0
        %v952 = vsel %vm636, %v929, 0
        %v954 = vsel %vm636, %v931, 0
        %v956 = vsel %vm636, %v933, 0
        %v958 = vsel %vm636, %v935, 0
        %960 = vmatprep.subr.mxu0 0.0
        %961 = vmatpush1.xpose.msra.mxu0 %v944
        %962 = vmatprep.subr.mxu0 0.0
        %963 = vmatpush1.xpose.msra.mxu0 %v946
        %964 = vmatprep.subr.mxu0 0.0
        %965 = vmatpush1.xpose.msra.mxu0 %v948
        %966 = vmatprep.subr.mxu0 0.0
        %967 = vmatpush1.xpose.msra.mxu0 %v950
        %968 = vmatprep.subr.mxu0 0.0
        %969 = vmatpush1.xpose.msra.mxu0 %v952
        %970 = vmatprep.subr.mxu0 0.0
        %971 = vmatpush1.xpose.msra.mxu0 %v954
        %972 = vmatprep.subr.mxu0 0.0
        %973 = vmatpush1.xpose.msra.mxu0 %v956
        %974 = vmatprep.subr.mxu0 0.0
        %975 = vmatpush1.xpose.msra.mxu0 %v958
        %976 = vmatprep.subr.mxu0 0.0
        %977 = vmatpush1.xpose.msra.mxu0 0.0
        %978 = vmatprep.subr.mxu0 0.0
        %979 = vmatpush1.xpose.msra.mxu0 0.0
        %980 = vmatprep.subr.mxu0 0.0
        %981 = vmatpush1.xpose.msra.mxu0 0.0
        %982 = vmatprep.subr.mxu0 0.0
        %983 = vmatpush1.xpose.msra.mxu0 0.0
        %984 = vmatprep.subr.mxu0 0.0
        %985 = vmatpush1.xpose.msra.mxu0 0.0
        %986 = vmatprep.subr.mxu0 0.0
        %987 = vmatpush1.xpose.msra.mxu0 0.0
        %988 = vmatprep.subr.mxu0 0.0
        %989 = vmatpush1.xpose.msra.mxu0 0.0
        %990 = vmatprep.subr.mxu0 0.0
        %991 = vmatpush1.xpose.msra.mxu0 0.0
        %992 = vmatprep.subr.mxu0 0.0
        %993 = vmatpush1.xpose.msra.mxu0 0.0
        %994 = vmatprep.subr.mxu0 0.0
        %995 = vmatpush1.xpose.msra.mxu0 0.0
        %996 = vmatprep.subr.mxu0 0.0
        %997 = vmatpush1.xpose.msra.mxu0 0.0
        %998 = vmatprep.subr.mxu0 0.0
        %999 = vmatpush1.xpose.msra.mxu0 0.0
        %1000 = vmatprep.subr.mxu0 0.0
        %1001 = vmatpush1.xpose.msra.mxu0 0.0
        %1002 = vmatprep.subr.mxu0 0.0
        %1003 = vmatpush1.xpose.msra.mxu0 0.0
        %1004 = vmatprep.subr.mxu0 0.0
        %1005 = vmatpush1.xpose.msra.mxu0 0.0
        %1006 = vmatprep.subr.mxu0 0.0
        %1007 = vmatpush1.xpose.msra.mxu0 0.0
        %1008 = vmatprep.subr.mxu0 0.0
        %1009 = vmatpush1.xpose.msra.mxu0 0.0
        %1010 = vmatprep.subr.mxu0 0.0
        %1011 = vmatpush1.xpose.msra.mxu0 0.0
        %1012 = vmatprep.subr.mxu0 0.0
        %1013 = vmatpush1.xpose.msra.mxu0 0.0
        %1014 = vmatprep.subr.mxu0 0.0
        %1015 = vmatpush1.xpose.msra.mxu0 0.0
        %1016 = vmatprep.subr.mxu0 0.0
        %1017 = vmatpush1.xpose.msra.mxu0 0.0
        %1018 = vmatprep.subr.mxu0 0.0
        %1019 = vmatpush1.xpose.msra.mxu0 0.0
        %1020 = vmatprep.subr.mxu0 0.0
        %1021 = vmatpush1.xpose.msra.mxu0 0.0
        %1022 = vmatprep.subr.mxu0 0.0
        %1023 = vmatpush1.xpose.msra.mxu0 0.0
        %1024 = vmatprep.mubr.f32.mxu0 0.0
        %1025 = vmatmul.mubr.f32.gmra.mrb[0].mxu0 %v936
        %v1026 = vpop.f32.mrb[0].mxu0
        %v1027 = vadd.f32 0.0, %v1026
        %v1028 = vpop.f32.mrb[0].mxu0
        %1029 = vmatprep.mubr.f32.mxu0 0.0
        %1030 = vmatmul.mubr.f32.gmra.mrb[0].mxu0 %v938
        %v1031 = vpop.f32.mrb[0].mxu0
        %v1032 = vadd.f32 0.0, %v1031
        %v1033 = vpop.f32.mrb[0].mxu0
        %1034 = vmatprep.mubr.f32.mxu0 0.0
        %1035 = vmatmul.mubr.f32.gmra.mrb[0].mxu0 %v940
        %v1036 = vpop.f32.mrb[0].mxu0
        %v1037 = vadd.f32 0.0, %v1036
        %v1038 = vpop.f32.mrb[0].mxu0
        %1039 = vmatprep.mubr.f32.mxu0 0.0
        %1040 = vmatmul.mubr.f32.gmra.mrb[0].mxu0 %v942
        %v1041 = vpop.f32.mrb[0].mxu0
        %v1042 = vadd.f32 0.0, %v1041
        %v1043 = vpop.f32.mrb[0].mxu0
        %1044 = vdwg.mxu0
        %v1045 = vsel %vm758, %v1027, -inf
        %1046 = vmax.xlane.f32.xlu0 %v1045
        %v1047 = vpop.xlane.xlu0 %1046
        %v1048 = vsel %vm758, %v1032, -inf
        %1049 = vmax.xlane.f32.xlu0 %v1048
        %v1050 = vpop.xlane.xlu0 %1049
        %v1051 = vsel %vm758, %v1037, -inf
        %1052 = vmax.xlane.f32.xlu0 %v1051
        %v1053 = vpop.xlane.xlu0 %1052
        %v1054 = vsel %vm758, %v1042, -inf
        %1055 = vmax.xlane.f32.xlu0 %v1054
        %v1056 = vpop.xlane.xlu0 %1055
        %v1057 = vsub.f32 %v1027, %v1047
        %v1058 = vsub.f32 %v1032, %v1050
        %v1059 = vsub.f32 %v1037, %v1053
        %v1060 = vsub.f32 %v1042, %v1056
        %v1061 = vmul.f32 %v1057, 1.442695
        %v1062 = vpow.pop %v1061
        %v1063 = vmul.f32 %v1058, 1.442695
        %v1064 = vpow.pop %v1063
        %v1065 = vmul.f32 %v1059, 1.442695
        %v1066 = vpow.pop %v1065
        %v1067 = vmul.f32 %v1060, 1.442695
        %v1068 = vpow.pop %v1067
        %v1069 = vsel %vm758, %v1062, 0.0
        %1070 = vadd.xlane.f32.xlu0 %v1069
        %v1071 = vpop.xlane.xlu0 %1070
        %v1072 = vsel %vm758, %v1064, 0.0
        %1073 = vadd.xlane.f32.xlu0 %v1072
        %v1074 = vpop.xlane.xlu0 %1073
        %v1075 = vsel %vm758, %v1066, 0.0
        %1076 = vadd.xlane.f32.xlu0 %v1075
        %v1077 = vpop.xlane.xlu0 %1076
        %v1078 = vsel %vm758, %v1068, 0.0
        %1079 = vadd.xlane.f32.xlu0 %v1078
        %v1080 = vpop.xlane.xlu0 %1079
        %v1081 = vrcp.pop %v1071
        %v1082 = vrcp.pop %v1074
        %v1083 = vrcp.pop %v1077
        %v1084 = vrcp.pop %v1080
        %v1085 = vmul.f32 %v1071, %v1081
        %v1086 = vmul.f32 %v1074, %v1082
        %v1087 = vmul.f32 %v1077, %v1083
        %v1088 = vmul.f32 %v1080, %v1084
        %v1089 = vsub.f32 2.0, %v1085
        %v1090 = vsub.f32 2.0, %v1086
        %v1091 = vsub.f32 2.0, %v1087
        %v1092 = vsub.f32 2.0, %v1088
        %v1093 = vmul.f32 %v1081, %v1089
        %v1094 = vmul.f32 %v1082, %v1090
        %v1095 = vmul.f32 %v1083, %v1091
        %v1096 = vmul.f32 %v1084, %v1092
        %1105 = vrot.lane.b32.xlu0 %v628, 96
        %v1106 = vpop.permute.xlu0 %1105
        %1107 = vrot.lane.b32.xlu0 %v629, 96
        %v1108 = vpop.permute.xlu0 %1107
        %1109 = vrot.lane.b32.xlu0 %v630, 96
        %v1110 = vpop.permute.xlu0 %1109
        %1111 = vrot.lane.b32.xlu0 %v631, 96
        %v1112 = vpop.permute.xlu0 %1111
        %1113 = vrot.lane.b32.xlu0 %v632, 96
        %v1114 = vpop.permute.xlu0 %1113
        %1115 = vrot.lane.b32.xlu0 %v633, 96
        %v1116 = vpop.permute.xlu0 %1115
        %1117 = vrot.lane.b32.xlu0 %v634, 96
        %v1118 = vpop.permute.xlu0 %1117
        %1119 = vrot.lane.b32.xlu0 %v635, 96
        %v1120 = vpop.permute.xlu0 %1119
        %v1130 = vsel %vm758, %v1062, 0
        %v1133 = vsel %vm758, %v1064, 0
        %v1136 = vsel %vm758, %v1066, 0
        %v1139 = vsel %vm758, %v1068, 0
        %1141 = vmatprep.subr.mxu0 0.0
        %1142 = vmatpush1.msra.mxu0 %v1106
        %1143 = vmatprep.subr.mxu0 0.0
        %1144 = vmatpush1.msra.mxu0 %v1108
        %1145 = vmatprep.subr.mxu0 0.0
        %1146 = vmatpush1.msra.mxu0 %v1110
        %1147 = vmatprep.subr.mxu0 0.0
        %1148 = vmatpush1.msra.mxu0 %v1112
        %1149 = vmatprep.subr.mxu0 0.0
        %1150 = vmatpush1.msra.mxu0 %v1114
        %1151 = vmatprep.subr.mxu0 0.0
        %1152 = vmatpush1.msra.mxu0 %v1116
        %1153 = vmatprep.subr.mxu0 0.0
        %1154 = vmatpush1.msra.mxu0 %v1118
        %1155 = vmatprep.subr.mxu0 0.0
        %1156 = vmatpush1.msra.mxu0 %v1120
        %1157 = vmatprep.subr.mxu0 0.0
        %1158 = vmatpush1.msra.mxu0 0.0
        %1159 = vmatprep.subr.mxu0 0.0
        %1160 = vmatpush1.msra.mxu0 0.0
        %1161 = vmatprep.subr.mxu0 0.0
        %1162 = vmatpush1.msra.mxu0 0.0
        %1163 = vmatprep.subr.mxu0 0.0
        %1164 = vmatpush1.msra.mxu0 0.0
        %1165 = vmatprep.subr.mxu0 0.0
        %1166 = vmatpush1.msra.mxu0 0.0
        %1167 = vmatprep.subr.mxu0 0.0
        %1168 = vmatpush1.msra.mxu0 0.0
        %1169 = vmatprep.subr.mxu0 0.0
        %1170 = vmatpush1.msra.mxu0 0.0
        %1171 = vmatprep.subr.mxu0 0.0
        %1172 = vmatpush1.msra.mxu0 0.0
        %1173 = vmatprep.subr.mxu0 0.0
        %1174 = vmatpush1.msra.mxu0 0.0
        %1175 = vmatprep.subr.mxu0 0.0
        %1176 = vmatpush1.msra.mxu0 0.0
        %1177 = vmatprep.subr.mxu0 0.0
        %1178 = vmatpush1.msra.mxu0 0.0
        %1179 = vmatprep.subr.mxu0 0.0
        %1180 = vmatpush1.msra.mxu0 0.0
        %1181 = vmatprep.subr.mxu0 0.0
        %1182 = vmatpush1.msra.mxu0 0.0
        %1183 = vmatprep.subr.mxu0 0.0
        %1184 = vmatpush1.msra.mxu0 0.0
        %1185 = vmatprep.subr.mxu0 0.0
        %1186 = vmatpush1.msra.mxu0 0.0
        %1187 = vmatprep.subr.mxu0 0.0
        %1188 = vmatpush1.msra.mxu0 0.0
        %1189 = vmatprep.subr.mxu0 0.0
        %1190 = vmatpush1.msra.mxu0 0.0
        %1191 = vmatprep.subr.mxu0 0.0
        %1192 = vmatpush1.msra.mxu0 0.0
        %1193 = vmatprep.subr.mxu0 0.0
        %1194 = vmatpush1.msra.mxu0 0.0
        %1195 = vmatprep.subr.mxu0 0.0
        %1196 = vmatpush1.msra.mxu0 0.0
        %1197 = vmatprep.subr.mxu0 0.0
        %1198 = vmatpush1.msra.mxu0 0.0
        %1199 = vmatprep.subr.mxu0 0.0
        %1200 = vmatpush1.msra.mxu0 0.0
        %1201 = vmatprep.subr.mxu0 0.0
        %1202 = vmatpush1.msra.mxu0 0.0
        %1203 = vmatprep.subr.mxu0 0.0
        %1204 = vmatpush1.msra.mxu0 0.0
        %1205 = vmatprep.mubr.f32.mxu0 0.0
        %1206 = vmatmul.mubr.f32.gmra.mrb[0].mxu0 %v1130
        %v1207 = vpop.f32.mrb[0].mxu0
        %v1208 = vadd.f32 0.0, %v1207
        %v1209 = vpop.f32.mrb[0].mxu0
        %1210 = vmatprep.mubr.f32.mxu0 0.0
        %1211 = vmatmul.mubr.f32.gmra.mrb[0].mxu0 %v1133
        %v1212 = vpop.f32.mrb[0].mxu0
        %v1213 = vadd.f32 0.0, %v1212
        %v1214 = vpop.f32.mrb[0].mxu0
        %1215 = vmatprep.mubr.f32.mxu0 0.0
        %1216 = vmatmul.mubr.f32.gmra.mrb[0].mxu0 %v1136
        %v1217 = vpop.f32.mrb[0].mxu0
        %v1218 = vadd.f32 0.0, %v1217
        %v1219 = vpop.f32.mrb[0].mxu0
        %1220 = vmatprep.mubr.f32.mxu0 0.0
        %1221 = vmatmul.mubr.f32.gmra.mrb[0].mxu0 %v1139
        %v1222 = vpop.f32.mrb[0].mxu0
        %v1223 = vadd.f32 0.0, %v1222
        %v1224 = vpop.f32.mrb[0].mxu0
        %1225 = vdwg.mxu0
        %v1226 = vmul.f32 %v1208, %v1093
        %v1227 = vmul.f32 %v1213, %v1094
        %v1228 = vmul.f32 %v1218, %v1095
        %v1229 = vmul.f32 %v1223, %v1096
        %1230 = vrot.lane.b32.xlu0 %v616, 64
        %v1231 = vpop.permute.xlu0 %1230
        %1232 = vrot.lane.b32.xlu0 %v617, 64
        %v1233 = vpop.permute.xlu0 %1232
        %1234 = vrot.lane.b32.xlu0 %v618, 64
        %v1235 = vpop.permute.xlu0 %1234
        %1236 = vrot.lane.b32.xlu0 %v619, 64
        %v1237 = vpop.permute.xlu0 %1236
        %1238 = vrot.lane.b32.xlu0 %v620, 64
        %v1239 = vpop.permute.xlu0 %1238
        %1240 = vrot.lane.b32.xlu0 %v621, 64
        %v1241 = vpop.permute.xlu0 %1240
        %1242 = vrot.lane.b32.xlu0 %v622, 64
        %v1243 = vpop.permute.xlu0 %1242
        %1244 = vrot.lane.b32.xlu0 %v623, 64
        %v1245 = vpop.permute.xlu0 %1244
        %1246 = vrot.lane.b32.xlu0 %v624, 64
        %v1247 = vpop.permute.xlu0 %1246
        %1248 = vrot.lane.b32.xlu0 %v625, 64
        %v1249 = vpop.permute.xlu0 %1248
        %1250 = vrot.lane.b32.xlu0 %v626, 64
        %v1251 = vpop.permute.xlu0 %1250
        %1252 = vrot.lane.b32.xlu0 %v627, 64
        %v1253 = vpop.permute.xlu0 %1252
        %v1254 = vsel %vm636, %v1231, 0
        %v1256 = vsel %vm636, %v1233, 0
        %v1258 = vsel %vm636, %v1235, 0
        %v1260 = vsel %vm636, %v1237, 0
        %v1262 = vsel %vm636, %v1239, 0
        %v1264 = vsel %vm636, %v1241, 0
        %v1266 = vsel %vm636, %v1243, 0
        %v1268 = vsel %vm636, %v1245, 0
        %v1270 = vsel %vm636, %v1247, 0
        %v1272 = vsel %vm636, %v1249, 0
        %v1274 = vsel %vm636, %v1251, 0
        %v1276 = vsel %vm636, %v1253, 0
        %1278 = vmatprep.subr.mxu0 0.0
        %1279 = vmatpush1.xpose.msra.mxu0 %v1262
        %1280 = vmatprep.subr.mxu0 0.0
        %1281 = vmatpush1.xpose.msra.mxu0 %v1264
        %1282 = vmatprep.subr.mxu0 0.0
        %1283 = vmatpush1.xpose.msra.mxu0 %v1266
        %1284 = vmatprep.subr.mxu0 0.0
        %1285 = vmatpush1.xpose.msra.mxu0 %v1268
        %1286 = vmatprep.subr.mxu0 0.0
        %1287 = vmatpush1.xpose.msra.mxu0 %v1270
        %1288 = vmatprep.subr.mxu0 0.0
        %1289 = vmatpush1.xpose.msra.mxu0 %v1272
        %1290 = vmatprep.subr.mxu0 0.0
        %1291 = vmatpush1.xpose.msra.mxu0 %v1274
        %1292 = vmatprep.subr.mxu0 0.0
        %1293 = vmatpush1.xpose.msra.mxu0 %v1276
        %1294 = vmatprep.subr.mxu0 0.0
        %1295 = vmatpush1.xpose.msra.mxu0 0.0
        %1296 = vmatprep.subr.mxu0 0.0
        %1297 = vmatpush1.xpose.msra.mxu0 0.0
        %1298 = vmatprep.subr.mxu0 0.0
        %1299 = vmatpush1.xpose.msra.mxu0 0.0
        %1300 = vmatprep.subr.mxu0 0.0
        %1301 = vmatpush1.xpose.msra.mxu0 0.0
        %1302 = vmatprep.subr.mxu0 0.0
        %1303 = vmatpush1.xpose.msra.mxu0 0.0
        %1304 = vmatprep.subr.mxu0 0.0
        %1305 = vmatpush1.xpose.msra.mxu0 0.0
        %1306 = vmatprep.subr.mxu0 0.0
        %1307 = vmatpush1.xpose.msra.mxu0 0.0
        %1308 = vmatprep.subr.mxu0 0.0
        %1309 = vmatpush1.xpose.msra.mxu0 0.0
        %1310 = vmatprep.subr.mxu0 0.0
        %1311 = vmatpush1.xpose.msra.mxu0 0.0
        %1312 = vmatprep.subr.mxu0 0.0
        %1313 = vmatpush1.xpose.msra.mxu0 0.0
        %1314 = vmatprep.subr.mxu0 0.0
        %1315 = vmatpush1.xpose.msra.mxu0 0.0
        %1316 = vmatprep.subr.mxu0 0.0
        %1317 = vmatpush1.xpose.msra.mxu0 0.0
        %1318 = vmatprep.subr.mxu0 0.0
        %1319 = vmatpush1.xpose.msra.mxu0 0.0
        %1320 = vmatprep.subr.mxu0 0.0
        %1321 = vmatpush1.xpose.msra.mxu0 0.0
        %1322 = vmatprep.subr.mxu0 0.0
        %1323 = vmatpush1.xpose.msra.mxu0 0.0
        %1324 = vmatprep.subr.mxu0 0.0
        %1325 = vmatpush1.xpose.msra.mxu0 0.0
        %1326 = vmatprep.subr.mxu0 0.0
        %1327 = vmatpush1.xpose.msra.mxu0 0.0
        %1328 = vmatprep.subr.mxu0 0.0
        %1329 = vmatpush1.xpose.msra.mxu0 0.0
        %1330 = vmatprep.subr.mxu0 0.0
        %1331 = vmatpush1.xpose.msra.mxu0 0.0
        %1332 = vmatprep.subr.mxu0 0.0
        %1333 = vmatpush1.xpose.msra.mxu0 0.0
        %1334 = vmatprep.subr.mxu0 0.0
        %1335 = vmatpush1.xpose.msra.mxu0 0.0
        %1336 = vmatprep.subr.mxu0 0.0
        %1337 = vmatpush1.xpose.msra.mxu0 0.0
        %1338 = vmatprep.subr.mxu0 0.0
        %1339 = vmatpush1.xpose.msra.mxu0 0.0
        %1340 = vmatprep.subr.mxu0 0.0
        %1341 = vmatpush1.xpose.msra.mxu0 0.0
        %1342 = vmatprep.mubr.f32.mxu0 0.0
        %1343 = vmatmul.mubr.f32.gmra.mrb[0].mxu0 %v1254
        %v1344 = vpop.f32.mrb[0].mxu0
        %v1345 = vadd.f32 0.0, %v1344
        %v1346 = vpop.f32.mrb[0].mxu0
        %1347 = vmatprep.mubr.f32.mxu0 0.0
        %1348 = vmatmul.mubr.f32.gmra.mrb[0].mxu0 %v1256
        %v1349 = vpop.f32.mrb[0].mxu0
        %v1350 = vadd.f32 0.0, %v1349
        %v1351 = vpop.f32.mrb[0].mxu0
        %1352 = vmatprep.mubr.f32.mxu0 0.0
        %1353 = vmatmul.mubr.f32.gmra.mrb[0].mxu0 %v1258
        %v1354 = vpop.f32.mrb[0].mxu0
        %v1355 = vadd.f32 0.0, %v1354
        %v1356 = vpop.f32.mrb[0].mxu0
        %1357 = vmatprep.mubr.f32.mxu0 0.0
        %1358 = vmatmul.mubr.f32.gmra.mrb[0].mxu0 %v1260
        %v1359 = vpop.f32.mrb[0].mxu0
        %v1360 = vadd.f32 0.0, %v1359
        %v1361 = vpop.f32.mrb[0].mxu0
        %1362 = vdwg.mxu0
        %v1363 = vsel %vm758, %v1345, -inf
        %1364 = vmax.xlane.f32.xlu0 %v1363
        %v1365 = vpop.xlane.xlu0 %1364
        %v1366 = vsel %vm758, %v1350, -inf
        %1367 = vmax.xlane.f32.xlu0 %v1366
        %v1368 = vpop.xlane.xlu0 %1367
        %v1369 = vsel %vm758, %v1355, -inf
        %1370 = vmax.xlane.f32.xlu0 %v1369
        %v1371 = vpop.xlane.xlu0 %1370
        %v1372 = vsel %vm758, %v1360, -inf
        %1373 = vmax.xlane.f32.xlu0 %v1372
        %v1374 = vpop.xlane.xlu0 %1373
        %v1375 = vsub.f32 %v1345, %v1365
        %v1376 = vsub.f32 %v1350, %v1368
        %v1377 = vsub.f32 %v1355, %v1371
        %v1378 = vsub.f32 %v1360, %v1374
        %v1379 = vmul.f32 %v1375, 1.442695
        %v1380 = vpow.pop %v1379
        %v1381 = vmul.f32 %v1376, 1.442695
        %v1382 = vpow.pop %v1381
        %v1383 = vmul.f32 %v1377, 1.442695
        %v1384 = vpow.pop %v1383
        %v1385 = vmul.f32 %v1378, 1.442695
        %v1386 = vpow.pop %v1385
        %v1387 = vsel %vm758, %v1380, 0.0
        %1388 = vadd.xlane.f32.xlu0 %v1387
        %v1389 = vpop.xlane.xlu0 %1388
        %v1390 = vsel %vm758, %v1382, 0.0
        %1391 = vadd.xlane.f32.xlu0 %v1390
        %v1392 = vpop.xlane.xlu0 %1391
        %v1393 = vsel %vm758, %v1384, 0.0
        %1394 = vadd.xlane.f32.xlu0 %v1393
        %v1395 = vpop.xlane.xlu0 %1394
        %v1396 = vsel %vm758, %v1386, 0.0
        %1397 = vadd.xlane.f32.xlu0 %v1396
        %v1398 = vpop.xlane.xlu0 %1397
        %v1399 = vrcp.pop %v1389
        %v1400 = vrcp.pop %v1392
        %v1401 = vrcp.pop %v1395
        %v1402 = vrcp.pop %v1398
        %v1403 = vmul.f32 %v1389, %v1399
        %v1404 = vmul.f32 %v1392, %v1400
        %v1405 = vmul.f32 %v1395, %v1401
        %v1406 = vmul.f32 %v1398, %v1402
        %v1407 = vsub.f32 2.0, %v1403
        %v1408 = vsub.f32 2.0, %v1404
        %v1409 = vsub.f32 2.0, %v1405
        %v1410 = vsub.f32 2.0, %v1406
        %v1411 = vmul.f32 %v1399, %v1407
        %v1412 = vmul.f32 %v1400, %v1408
        %v1413 = vmul.f32 %v1401, %v1409
        %v1414 = vmul.f32 %v1402, %v1410
        %1415 = vrot.lane.b32.xlu0 %v628, 64
        %v1416 = vpop.permute.xlu0 %1415
        %1417 = vrot.lane.b32.xlu0 %v629, 64
        %v1418 = vpop.permute.xlu0 %1417
        %1419 = vrot.lane.b32.xlu0 %v630, 64
        %v1420 = vpop.permute.xlu0 %1419
        %1421 = vrot.lane.b32.xlu0 %v631, 64
        %v1422 = vpop.permute.xlu0 %1421
        %1423 = vrot.lane.b32.xlu0 %v632, 64
        %v1424 = vpop.permute.xlu0 %1423
        %1425 = vrot.lane.b32.xlu0 %v633, 64
        %v1426 = vpop.permute.xlu0 %1425
        %1427 = vrot.lane.b32.xlu0 %v634, 64
        %v1428 = vpop.permute.xlu0 %1427
        %1429 = vrot.lane.b32.xlu0 %v635, 64
        %v1430 = vpop.permute.xlu0 %1429
        %v1440 = vsel %vm758, %v1380, 0
        %v1443 = vsel %vm758, %v1382, 0
        %v1446 = vsel %vm758, %v1384, 0
        %v1449 = vsel %vm758, %v1386, 0
        %1451 = vmatprep.subr.mxu0 0.0
        %1452 = vmatpush1.msra.mxu0 %v1416
        %1453 = vmatprep.subr.mxu0 0.0
        %1454 = vmatpush1.msra.mxu0 %v1418
        %1455 = vmatprep.subr.mxu0 0.0
        %1456 = vmatpush1.msra.mxu0 %v1420
        %1457 = vmatprep.subr.mxu0 0.0
        %1458 = vmatpush1.msra.mxu0 %v1422
        %1459 = vmatprep.subr.mxu0 0.0
        %1460 = vmatpush1.msra.mxu0 %v1424
        %1461 = vmatprep.subr.mxu0 0.0
        %1462 = vmatpush1.msra.mxu0 %v1426
        %1463 = vmatprep.subr.mxu0 0.0
        %1464 = vmatpush1.msra.mxu0 %v1428
        %1465 = vmatprep.subr.mxu0 0.0
        %1466 = vmatpush1.msra.mxu0 %v1430
        %1467 = vmatprep.subr.mxu0 0.0
        %1468 = vmatpush1.msra.mxu0 0.0
        %1469 = vmatprep.subr.mxu0 0.0
        %1470 = vmatpush1.msra.mxu0 0.0
        %1471 = vmatprep.subr.mxu0 0.0
        %1472 = vmatpush1.msra.mxu0 0.0
        %1473 = vmatprep.subr.mxu0 0.0
        %1474 = vmatpush1.msra.mxu0 0.0
        %1475 = vmatprep.subr.mxu0 0.0
        %1476 = vmatpush1.msra.mxu0 0.0
        %1477 = vmatprep.subr.mxu0 0.0
        %1478 = vmatpush1.msra.mxu0 0.0
        %1479 = vmatprep.subr.mxu0 0.0
        %1480 = vmatpush1.msra.mxu0 0.0
        %1481 = vmatprep.subr.mxu0 0.0
        %1482 = vmatpush1.msra.mxu0 0.0
        %1483 = vmatprep.subr.mxu0 0.0
        %1484 = vmatpush1.msra.mxu0 0.0
        %1485 = vmatprep.subr.mxu0 0.0
        %1486 = vmatpush1.msra.mxu0 0.0
        %1487 = vmatprep.subr.mxu0 0.0
        %1488 = vmatpush1.msra.mxu0 0.0
        %1489 = vmatprep.subr.mxu0 0.0
        %1490 = vmatpush1.msra.mxu0 0.0
        %1491 = vmatprep.subr.mxu0 0.0
        %1492 = vmatpush1.msra.mxu0 0.0
        %1493 = vmatprep.subr.mxu0 0.0
        %1494 = vmatpush1.msra.mxu0 0.0
        %1495 = vmatprep.subr.mxu0 0.0
        %1496 = vmatpush1.msra.mxu0 0.0
        %1497 = vmatprep.subr.mxu0 0.0
        %1498 = vmatpush1.msra.mxu0 0.0
        %1499 = vmatprep.subr.mxu0 0.0
        %1500 = vmatpush1.msra.mxu0 0.0
        %1501 = vmatprep.subr.mxu0 0.0
        %1502 = vmatpush1.msra.mxu0 0.0
        %1503 = vmatprep.subr.mxu0 0.0
        %1504 = vmatpush1.msra.mxu0 0.0
        %1505 = vmatprep.subr.mxu0 0.0
        %1506 = vmatpush1.msra.mxu0 0.0
        %1507 = vmatprep.subr.mxu0 0.0
        %1508 = vmatpush1.msra.mxu0 0.0
        %1509 = vmatprep.subr.mxu0 0.0
        %1510 = vmatpush1.msra.mxu0 0.0
        %1511 = vmatprep.subr.mxu0 0.0
        %1512 = vmatpush1.msra.mxu0 0.0
        %1513 = vmatprep.subr.mxu0 0.0
        %1514 = vmatpush1.msra.mxu0 0.0
        %1515 = vmatprep.mubr.f32.mxu0 0.0
        %1516 = vmatmul.mubr.f32.gmra.mrb[0].mxu0 %v1440
        %v1517 = vpop.f32.mrb[0].mxu0
        %v1518 = vadd.f32 0.0, %v1517
        %v1519 = vpop.f32.mrb[0].mxu0
        %1520 = vmatprep.mubr.f32.mxu0 0.0
        %1521 = vmatmul.mubr.f32.gmra.mrb[0].mxu0 %v1443
        %v1522 = vpop.f32.mrb[0].mxu0
        %v1523 = vadd.f32 0.0, %v1522
        %v1524 = vpop.f32.mrb[0].mxu0
        %1525 = vmatprep.mubr.f32.mxu0 0.0
        %1526 = vmatmul.mubr.f32.gmra.mrb[0].mxu0 %v1446
        %v1527 = vpop.f32.mrb[0].mxu0
        %v1528 = vadd.f32 0.0, %v1527
        %v1529 = vpop.f32.mrb[0].mxu0
        %1530 = vmatprep.mubr.f32.mxu0 0.0
        %1531 = vmatmul.mubr.f32.gmra.mrb[0].mxu0 %v1449
        %v1532 = vpop.f32.mrb[0].mxu0
        %v1533 = vadd.f32 0.0, %v1532
        %v1534 = vpop.f32.mrb[0].mxu0
        %1535 = vdwg.mxu0
        %v1536 = vmul.f32 %v1518, %v1411
        %v1537 = vmul.f32 %v1523, %v1412
        %v1538 = vmul.f32 %v1528, %v1413
        %v1539 = vmul.f32 %v1533, %v1414
        %1540 = vrot.lane.b32.xlu0 %v616, 32
        %v1541 = vpop.permute.xlu0 %1540
        %1542 = vrot.lane.b32.xlu0 %v617, 32
        %v1543 = vpop.permute.xlu0 %1542
        %1544 = vrot.lane.b32.xlu0 %v618, 32
        %v1545 = vpop.permute.xlu0 %1544
        %1546 = vrot.lane.b32.xlu0 %v619, 32
        %v1547 = vpop.permute.xlu0 %1546
        %1548 = vrot.lane.b32.xlu0 %v620, 32
        %v1549 = vpop.permute.xlu0 %1548
        %1550 = vrot.lane.b32.xlu0 %v621, 32
        %v1551 = vpop.permute.xlu0 %1550
        %1552 = vrot.lane.b32.xlu0 %v622, 32
        %v1553 = vpop.permute.xlu0 %1552
        %1554 = vrot.lane.b32.xlu0 %v623, 32
        %v1555 = vpop.permute.xlu0 %1554
        %1556 = vrot.lane.b32.xlu0 %v624, 32
        %v1557 = vpop.permute.xlu0 %1556
        %1558 = vrot.lane.b32.xlu0 %v625, 32
        %v1559 = vpop.permute.xlu0 %1558
        %1560 = vrot.lane.b32.xlu0 %v626, 32
        %v1561 = vpop.permute.xlu0 %1560
        %1562 = vrot.lane.b32.xlu0 %v627, 32
        %v1563 = vpop.permute.xlu0 %1562
        %v1564 = vsel %vm636, %v1541, 0
        %v1566 = vsel %vm636, %v1543, 0
        %v1568 = vsel %vm636, %v1545, 0
        %v1570 = vsel %vm636, %v1547, 0
        %v1572 = vsel %vm636, %v1549, 0
        %v1574 = vsel %vm636, %v1551, 0
        %v1576 = vsel %vm636, %v1553, 0
        %v1578 = vsel %vm636, %v1555, 0
        %v1580 = vsel %vm636, %v1557, 0
        %v1582 = vsel %vm636, %v1559, 0
        %v1584 = vsel %vm636, %v1561, 0
        %v1586 = vsel %vm636, %v1563, 0
        %1588 = vmatprep.subr.mxu0 0.0
        %1589 = vmatpush1.xpose.msra.mxu0 %v1572
        %1590 = vmatprep.subr.mxu0 0.0
        %1591 = vmatpush1.xpose.msra.mxu0 %v1574
        %1592 = vmatprep.subr.mxu0 0.0
        %1593 = vmatpush1.xpose.msra.mxu0 %v1576
        %1594 = vmatprep.subr.mxu0 0.0
        %1595 = vmatpush1.xpose.msra.mxu0 %v1578
        %1596 = vmatprep.subr.mxu0 0.0
        %1597 = vmatpush1.xpose.msra.mxu0 %v1580
        %1598 = vmatprep.subr.mxu0 0.0
        %1599 = vmatpush1.xpose.msra.mxu0 %v1582
        %1600 = vmatprep.subr.mxu0 0.0
        %1601 = vmatpush1.xpose.msra.mxu0 %v1584
        %1602 = vmatprep.subr.mxu0 0.0
        %1603 = vmatpush1.xpose.msra.mxu0 %v1586
        %1604 = vmatprep.subr.mxu0 0.0
        %1605 = vmatpush1.xpose.msra.mxu0 0.0
        %1606 = vmatprep.subr.mxu0 0.0
        %1607 = vmatpush1.xpose.msra.mxu0 0.0
        %1608 = vmatprep.subr.mxu0 0.0
        %1609 = vmatpush1.xpose.msra.mxu0 0.0
        %1610 = vmatprep.subr.mxu0 0.0
        %1611 = vmatpush1.xpose.msra.mxu0 0.0
        %1612 = vmatprep.subr.mxu0 0.0
        %1613 = vmatpush1.xpose.msra.mxu0 0.0
        %1614 = vmatprep.subr.mxu0 0.0
        %1615 = vmatpush1.xpose.msra.mxu0 0.0
        %1616 = vmatprep.subr.mxu0 0.0
        %1617 = vmatpush1.xpose.msra.mxu0 0.0
        %1618 = vmatprep.subr.mxu0 0.0
        %1619 = vmatpush1.xpose.msra.mxu0 0.0
        %1620 = vmatprep.subr.mxu0 0.0
        %1621 = vmatpush1.xpose.msra.mxu0 0.0
        %1622 = vmatprep.subr.mxu0 0.0
        %1623 = vmatpush1.xpose.msra.mxu0 0.0
        %1624 = vmatprep.subr.mxu0 0.0
        %1625 = vmatpush1.xpose.msra.mxu0 0.0
        %1626 = vmatprep.subr.mxu0 0.0
        %1627 = vmatpush1.xpose.msra.mxu0 0.0
        %1628 = vmatprep.subr.mxu0 0.0
        %1629 = vmatpush1.xpose.msra.mxu0 0.0
        %1630 = vmatprep.subr.mxu0 0.0
        %1631 = vmatpush1.xpose.msra.mxu0 0.0
        %1632 = vmatprep.subr.mxu0 0.0
        %1633 = vmatpush1.xpose.msra.mxu0 0.0
        %1634 = vmatprep.subr.mxu0 0.0
        %1635 = vmatpush1.xpose.msra.mxu0 0.0
        %1636 = vmatprep.subr.mxu0 0.0
        %1637 = vmatpush1.xpose.msra.mxu0 0.0
        %1638 = vmatprep.subr.mxu0 0.0
        %1639 = vmatpush1.xpose.msra.mxu0 0.0
        %1640 = vmatprep.subr.mxu0 0.0
        %1641 = vmatpush1.xpose.msra.mxu0 0.0
        %1642 = vmatprep.subr.mxu0 0.0
        %1643 = vmatpush1.xpose.msra.mxu0 0.0
        %1644 = vmatprep.subr.mxu0 0.0
        %1645 = vmatpush1.xpose.msra.mxu0 0.0
        %1646 = vmatprep.subr.mxu0 0.0
        %1647 = vmatpush1.xpose.msra.mxu0 0.0
        %1648 = vmatprep.subr.mxu0 0.0
        %1649 = vmatpush1.xpose.msra.mxu0 0.0
        %1650 = vmatprep.subr.mxu0 0.0
        %1651 = vmatpush1.xpose.msra.mxu0 0.0
        %1652 = vmatprep.mubr.f32.mxu0 0.0
        %1653 = vmatmul.mubr.f32.gmra.mrb[0].mxu0 %v1564
        %v1654 = vpop.f32.mrb[0].mxu0
        %v1655 = vadd.f32 0.0, %v1654
        %v1656 = vpop.f32.mrb[0].mxu0
        %1657 = vmatprep.mubr.f32.mxu0 0.0
        %1658 = vmatmul.mubr.f32.gmra.mrb[0].mxu0 %v1566
        %v1659 = vpop.f32.mrb[0].mxu0
        %v1660 = vadd.f32 0.0, %v1659
        %v1661 = vpop.f32.mrb[0].mxu0
        %1662 = vmatprep.mubr.f32.mxu0 0.0
        %1663 = vmatmul.mubr.f32.gmra.mrb[0].mxu0 %v1568
        %v1664 = vpop.f32.mrb[0].mxu0
        %v1665 = vadd.f32 0.0, %v1664
        %v1666 = vpop.f32.mrb[0].mxu0
        %1667 = vmatprep.mubr.f32.mxu0 0.0
        %1668 = vmatmul.mubr.f32.gmra.mrb[0].mxu0 %v1570
        %v1669 = vpop.f32.mrb[0].mxu0
        %v1670 = vadd.f32 0.0, %v1669
        %v1671 = vpop.f32.mrb[0].mxu0
        %1672 = vdwg.mxu0
        %v1673 = vsel %vm758, %v1655, -inf
        %1674 = vmax.xlane.f32.xlu0 %v1673
        %v1675 = vpop.xlane.xlu0 %1674
        %v1676 = vsel %vm758, %v1660, -inf
        %1677 = vmax.xlane.f32.xlu0 %v1676
        %v1678 = vpop.xlane.xlu0 %1677
        %v1679 = vsel %vm758, %v1665, -inf
        %1680 = vmax.xlane.f32.xlu0 %v1679
        %v1681 = vpop.xlane.xlu0 %1680
        %v1682 = vsel %vm758, %v1670, -inf
        %1683 = vmax.xlane.f32.xlu0 %v1682
        %v1684 = vpop.xlane.xlu0 %1683
        %v1685 = vsub.f32 %v1655, %v1675
        %v1686 = vsub.f32 %v1660, %v1678
        %v1687 = vsub.f32 %v1665, %v1681
        %v1688 = vsub.f32 %v1670, %v1684
        %v1689 = vmul.f32 %v1685, 1.442695
        %v1690 = vpow.pop %v1689
        %v1691 = vmul.f32 %v1686, 1.442695
        %v1692 = vpow.pop %v1691
        %v1693 = vmul.f32 %v1687, 1.442695
        %v1694 = vpow.pop %v1693
        %v1695 = vmul.f32 %v1688, 1.442695
        %v1696 = vpow.pop %v1695
        %v1697 = vsel %vm758, %v1690, 0.0
        %1698 = vadd.xlane.f32.xlu0 %v1697
        %v1699 = vpop.xlane.xlu0 %1698
        %v1700 = vsel %vm758, %v1692, 0.0
        %1701 = vadd.xlane.f32.xlu0 %v1700
        %v1702 = vpop.xlane.xlu0 %1701
        %v1703 = vsel %vm758, %v1694, 0.0
        %1704 = vadd.xlane.f32.xlu0 %v1703
        %v1705 = vpop.xlane.xlu0 %1704
        %v1706 = vsel %vm758, %v1696, 0.0
        %1707 = vadd.xlane.f32.xlu0 %v1706
        %v1708 = vpop.xlane.xlu0 %1707
        %v1709 = vrcp.pop %v1699
        %v1710 = vrcp.pop %v1702
        %v1711 = vrcp.pop %v1705
        %v1712 = vrcp.pop %v1708
        %v1713 = vmul.f32 %v1699, %v1709
        %v1714 = vmul.f32 %v1702, %v1710
        %v1715 = vmul.f32 %v1705, %v1711
        %v1716 = vmul.f32 %v1708, %v1712
        %v1717 = vsub.f32 2.0, %v1713
        %v1718 = vsub.f32 2.0, %v1714
        %v1719 = vsub.f32 2.0, %v1715
        %v1720 = vsub.f32 2.0, %v1716
        %v1721 = vmul.f32 %v1709, %v1717
        %v1722 = vmul.f32 %v1710, %v1718
        %v1723 = vmul.f32 %v1711, %v1719
        %v1724 = vmul.f32 %v1712, %v1720
        %1725 = vrot.lane.b32.xlu0 %v628, 32
        %v1726 = vpop.permute.xlu0 %1725
        %1727 = vrot.lane.b32.xlu0 %v629, 32
        %v1728 = vpop.permute.xlu0 %1727
        %1729 = vrot.lane.b32.xlu0 %v630, 32
        %v1730 = vpop.permute.xlu0 %1729
        %1731 = vrot.lane.b32.xlu0 %v631, 32
        %v1732 = vpop.permute.xlu0 %1731
        %1733 = vrot.lane.b32.xlu0 %v632, 32
        %v1734 = vpop.permute.xlu0 %1733
        %1735 = vrot.lane.b32.xlu0 %v633, 32
        %v1736 = vpop.permute.xlu0 %1735
        %1737 = vrot.lane.b32.xlu0 %v634, 32
        %v1738 = vpop.permute.xlu0 %1737
        %1739 = vrot.lane.b32.xlu0 %v635, 32
        %v1740 = vpop.permute.xlu0 %1739
        %v1750 = vsel %vm758, %v1690, 0
        %v1753 = vsel %vm758, %v1692, 0
        %v1756 = vsel %vm758, %v1694, 0
        %v1759 = vsel %vm758, %v1696, 0
        %1761 = vmatprep.subr.mxu0 0.0
        %1762 = vmatpush1.msra.mxu0 %v1726
        %1763 = vmatprep.subr.mxu0 0.0
        %1764 = vmatpush1.msra.mxu0 %v1728
        %1765 = vmatprep.subr.mxu0 0.0
        %1766 = vmatpush1.msra.mxu0 %v1730
        %1767 = vmatprep.subr.mxu0 0.0
        %1768 = vmatpush1.msra.mxu0 %v1732
        %1769 = vmatprep.subr.mxu0 0.0
        %1770 = vmatpush1.msra.mxu0 %v1734
        %1771 = vmatprep.subr.mxu0 0.0
        %1772 = vmatpush1.msra.mxu0 %v1736
        %1773 = vmatprep.subr.mxu0 0.0
        %1774 = vmatpush1.msra.mxu0 %v1738
        %1775 = vmatprep.subr.mxu0 0.0
        %1776 = vmatpush1.msra.mxu0 %v1740
        %1777 = vmatprep.subr.mxu0 0.0
        %1778 = vmatpush1.msra.mxu0 0.0
        %1779 = vmatprep.subr.mxu0 0.0
        %1780 = vmatpush1.msra.mxu0 0.0
        %1781 = vmatprep.subr.mxu0 0.0
        %1782 = vmatpush1.msra.mxu0 0.0
        %1783 = vmatprep.subr.mxu0 0.0
        %1784 = vmatpush1.msra.mxu0 0.0
        %1785 = vmatprep.subr.mxu0 0.0
        %1786 = vmatpush1.msra.mxu0 0.0
        %1787 = vmatprep.subr.mxu0 0.0
        %1788 = vmatpush1.msra.mxu0 0.0
        %1789 = vmatprep.subr.mxu0 0.0
        %1790 = vmatpush1.msra.mxu0 0.0
        %1791 = vmatprep.subr.mxu0 0.0
        %1792 = vmatpush1.msra.mxu0 0.0
        %1793 = vmatprep.subr.mxu0 0.0
        %1794 = vmatpush1.msra.mxu0 0.0
        %1795 = vmatprep.subr.mxu0 0.0
        %1796 = vmatpush1.msra.mxu0 0.0
        %1797 = vmatprep.subr.mxu0 0.0
        %1798 = vmatpush1.msra.mxu0 0.0
        %1799 = vmatprep.subr.mxu0 0.0
        %1800 = vmatpush1.msra.mxu0 0.0
        %1801 = vmatprep.subr.mxu0 0.0
        %1802 = vmatpush1.msra.mxu0 0.0
        %1803 = vmatprep.subr.mxu0 0.0
        %1804 = vmatpush1.msra.mxu0 0.0
        %1805 = vmatprep.subr.mxu0 0.0
        %1806 = vmatpush1.msra.mxu0 0.0
        %1807 = vmatprep.subr.mxu0 0.0
        %1808 = vmatpush1.msra.mxu0 0.0
        %1809 = vmatprep.subr.mxu0 0.0
        %1810 = vmatpush1.msra.mxu0 0.0
        %1811 = vmatprep.subr.mxu0 0.0
        %1812 = vmatpush1.msra.mxu0 0.0
        %1813 = vmatprep.subr.mxu0 0.0
        %1814 = vmatpush1.msra.mxu0 0.0
        %1815 = vmatprep.subr.mxu0 0.0
        %1816 = vmatpush1.msra.mxu0 0.0
        %1817 = vmatprep.subr.mxu0 0.0
        %1818 = vmatpush1.msra.mxu0 0.0
        %1819 = vmatprep.subr.mxu0 0.0
        %1820 = vmatpush1.msra.mxu0 0.0
        %1821 = vmatprep.subr.mxu0 0.0
        %1822 = vmatpush1.msra.mxu0 0.0
        %1823 = vmatprep.subr.mxu0 0.0
        %1824 = vmatpush1.msra.mxu0 0.0
        %1825 = vmatprep.mubr.f32.mxu0 0.0
        %1826 = vmatmul.mubr.f32.gmra.mrb[0].mxu0 %v1750
        %v1827 = vpop.f32.mrb[0].mxu0
        %v1828 = vadd.f32 0.0, %v1827
        %v1829 = vpop.f32.mrb[0].mxu0
        %1830 = vmatprep.mubr.f32.mxu0 0.0
        %1831 = vmatmul.mubr.f32.gmra.mrb[0].mxu0 %v1753
        %v1832 = vpop.f32.mrb[0].mxu0
        %v1833 = vadd.f32 0.0, %v1832
        %v1834 = vpop.f32.mrb[0].mxu0
        %1835 = vmatprep.mubr.f32.mxu0 0.0
        %1836 = vmatmul.mubr.f32.gmra.mrb[0].mxu0 %v1756
        %v1837 = vpop.f32.mrb[0].mxu0
        %v1838 = vadd.f32 0.0, %v1837
        %v1839 = vpop.f32.mrb[0].mxu0
        %1840 = vmatprep.mubr.f32.mxu0 0.0
        %1841 = vmatmul.mubr.f32.gmra.mrb[0].mxu0 %v1759
        %v1842 = vpop.f32.mrb[0].mxu0
        %v1843 = vadd.f32 0.0, %v1842
        %v1844 = vpop.f32.mrb[0].mxu0
        %1845 = vdwg.mxu0
        %v1846 = vmul.f32 %v1828, %v1721
        %v1847 = vmul.f32 %v1833, %v1722
        %v1848 = vmul.f32 %v1838, %v1723
        %v1849 = vmul.f32 %v1843, %v1724
        %1854 = vrot.lane.b32.xlu0 %v1226, 32
        %v1855 = vpop.permute.xlu0 %1854
        %1856 = vrot.lane.b32.xlu0 %v1227, 32
        %v1857 = vpop.permute.xlu0 %1856
        %1858 = vrot.lane.b32.xlu0 %v1228, 32
        %v1859 = vpop.permute.xlu0 %1858
        %1860 = vrot.lane.b32.xlu0 %v1229, 32
        %v1861 = vpop.permute.xlu0 %1860
        %1870 = vrot.lane.b32.xlu0 %v1536, 64
        %v1871 = vpop.permute.xlu0 %1870
        %1872 = vrot.lane.b32.xlu0 %v1537, 64
        %v1873 = vpop.permute.xlu0 %1872
        %1874 = vrot.lane.b32.xlu0 %v1538, 64
        %v1875 = vpop.permute.xlu0 %1874
        %1876 = vrot.lane.b32.xlu0 %v1539, 64
        %v1877 = vpop.permute.xlu0 %1876
        %1886 = vrot.lane.b32.xlu0 %v1846, 96
        %v1887 = vpop.permute.xlu0 %1886
        %1888 = vrot.lane.b32.xlu0 %v1847, 96
        %v1889 = vpop.permute.xlu0 %1888
        %1890 = vrot.lane.b32.xlu0 %v1848, 96
        %v1891 = vpop.permute.xlu0 %1890
        %1892 = vrot.lane.b32.xlu0 %v1849, 96
        %v1893 = vpop.permute.xlu0 %1892
        %v1898 = vsel %vm636, %v908, %v1855
        %v1899 = vsel %vm636, %v909, %v1857
        %v1900 = vsel %vm636, %v910, %v1859
        %v1901 = vsel %vm636, %v911, %v1861
        %v1902 = vsel %vm758, %v1898, %v1871
        %v1903 = vsel %vm758, %v1899, %v1873
        %v1904 = vsel %vm758, %v1900, %v1875
        %v1905 = vsel %vm758, %v1901, %v1877
        %vm1906 = vcmask 785408
        %v1907 = vsel %vm1906, %v1902, %v1887
        %v1908 = vsel %vm1906, %v1903, %v1889
        %v1909 = vsel %vm1906, %v1904, %v1891
        %v1910 = vsel %vm1906, %v1905, %v1893
        %v1911 = vld [vmem:[#allocation10] sm:$0xff]
        %v1912 = vld [vmem:[#allocation10 + $0x8] sm:$0xff]
        %v1913 = vld [vmem:[#allocation10 + $0x10] sm:$0xff]
        %v1914 = vld [vmem:[#allocation10 + $0x18] sm:$0xff]
        %v1915 = vld [vmem:[#allocation10 + $0x20] sm:$0xff]
        %v1916 = vld [vmem:[#allocation10 + $0x28] sm:$0xff]
        %v1917 = vld [vmem:[#allocation10 + $0x30] sm:$0xff]
        %v1918 = vld [vmem:[#allocation10 + $0x38] sm:$0xff]
        %v1919 = vld [vmem:[#allocation10 + $0x40] sm:$0xff]
        %v1920 = vld [vmem:[#allocation10 + $0x48] sm:$0xff]
        %v1921 = vld [vmem:[#allocation10 + $0x50] sm:$0xff]
        %v1922 = vld [vmem:[#allocation10 + $0x58] sm:$0xff]
        %v1923 = vld [vmem:[#allocation10 + $0x60] sm:$0xff]
        %v1924 = vld [vmem:[#allocation10 + $0x68] sm:$0xff]
        %v1925 = vld [vmem:[#allocation10 + $0x70] sm:$0xff]
        %v1926 = vld [vmem:[#allocation10 + $0x78] sm:$0xff]
        %v1927 = vld [vmem:[%s4] sm:$0x1]
        %v1929 = vlaneseq
        %v1930 = vshrl.u32 %v1929, 7
        %v1931 = vsub.s32 0, %v1930
        %v1932 = vrot.slane %v1927, %v1931
        %1934 = vmatprep.subr.mxu0 0.0
        %1935 = vmatpush1.msra.mxu0 %v1911
        %1936 = vmatprep.subr.mxu0 0.0
        %1937 = vmatpush1.msra.mxu0 %v1912
        %1938 = vmatprep.subr.mxu0 0.0
        %1939 = vmatpush1.msra.mxu0 %v1913
        %1940 = vmatprep.subr.mxu0 0.0
        %1941 = vmatpush1.msra.mxu0 %v1914
        %1942 = vmatprep.subr.mxu0 0.0
        %1943 = vmatpush1.msra.mxu0 %v1915
        %1944 = vmatprep.subr.mxu0 0.0
        %1945 = vmatpush1.msra.mxu0 %v1916
        %1946 = vmatprep.subr.mxu0 0.0
        %1947 = vmatpush1.msra.mxu0 %v1917
        %1948 = vmatprep.subr.mxu0 0.0
        %1949 = vmatpush1.msra.mxu0 %v1918
        %1950 = vmatprep.subr.mxu0 0.0
        %1951 = vmatpush1.msra.mxu0 %v1919
        %1952 = vmatprep.subr.mxu0 0.0
        %1953 = vmatpush1.msra.mxu0 %v1920
        %1954 = vmatprep.subr.mxu0 0.0
        %1955 = vmatpush1.msra.mxu0 %v1921
        %1956 = vmatprep.subr.mxu0 0.0
        %1957 = vmatpush1.msra.mxu0 %v1922
        %1958 = vmatprep.subr.mxu0 0.0
        %1959 = vmatpush1.msra.mxu0 %v1923
        %1960 = vmatprep.subr.mxu0 0.0
        %1961 = vmatpush1.msra.mxu0 %v1924
        %1962 = vmatprep.subr.mxu0 0.0
        %1963 = vmatpush1.msra.mxu0 %v1925
        %1964 = vmatprep.subr.mxu0 0.0
        %1965 = vmatpush1.msra.mxu0 %v1926
        %1966 = vmatprep.subr.mxu0 0.0
        %1967 = vmatpush1.msra.mxu0 0.0
        %1968 = vmatprep.subr.mxu0 0.0
        %1969 = vmatpush1.msra.mxu0 0.0
        %1970 = vmatprep.subr.mxu0 0.0
        %1971 = vmatpush1.msra.mxu0 0.0
        %1972 = vmatprep.subr.mxu0 0.0
        %1973 = vmatpush1.msra.mxu0 0.0
        %1974 = vmatprep.subr.mxu0 0.0
        %1975 = vmatpush1.msra.mxu0 0.0
        %1976 = vmatprep.subr.mxu0 0.0
        %1977 = vmatpush1.msra.mxu0 0.0
        %1978 = vmatprep.subr.mxu0 0.0
        %1979 = vmatpush1.msra.mxu0 0.0
        %1980 = vmatprep.subr.mxu0 0.0
        %1981 = vmatpush1.msra.mxu0 0.0
        %1982 = vmatprep.subr.mxu0 0.0
        %1983 = vmatpush1.msra.mxu0 0.0
        %1984 = vmatprep.subr.mxu0 0.0
        %1985 = vmatpush1.msra.mxu0 0.0
        %1986 = vmatprep.subr.mxu0 0.0
        %1987 = vmatpush1.msra.mxu0 0.0
        %1988 = vmatprep.subr.mxu0 0.0
        %1989 = vmatpush1.msra.mxu0 0.0
        %1990 = vmatprep.subr.mxu0 0.0
        %1991 = vmatpush1.msra.mxu0 0.0
        %1992 = vmatprep.subr.mxu0 0.0
        %1993 = vmatpush1.msra.mxu0 0.0
        %1994 = vmatprep.subr.mxu0 0.0
        %1995 = vmatpush1.msra.mxu0 0.0
        %1996 = vmatprep.subr.mxu0 0.0
        %1997 = vmatpush1.msra.mxu0 0.0
        %1998 = vmatprep.mubr.f32.mxu0 0.0
        %1999 = vmatmul.mubr.f32.gmra.mrb[0].mxu0 %v1907
        %v2000 = vpop.f32.mrb[0].mxu0
        %v2001 = vadd.f32 %v1932, %v2000
        %v2002 = vpop.f32.mrb[0].mxu0
        %2003 = vmatprep.mubr.f32.mxu0 0.0
        %2004 = vmatmul.mubr.f32.gmra.mrb[0].mxu0 %v1908
        %v2005 = vpop.f32.mrb[0].mxu0
        %v2006 = vadd.f32 %v1932, %v2005
        %v2007 = vpop.f32.mrb[0].mxu0
        %2008 = vmatprep.mubr.f32.mxu0 0.0
        %2009 = vmatmul.mubr.f32.gmra.mrb[0].mxu0 %v1909
        %v2010 = vpop.f32.mrb[0].mxu0
        %v2011 = vadd.f32 %v1932, %v2010
        %v2012 = vpop.f32.mrb[0].mxu0
        %2013 = vmatprep.mubr.f32.mxu0 0.0
        %2014 = vmatmul.mubr.f32.gmra.mrb[0].mxu0 %v1910
        %v2015 = vpop.f32.mrb[0].mxu0
        %v2016 = vadd.f32 %v1932, %v2015
        %v2017 = vpop.f32.mrb[0].mxu0
        %2018 = vdwg.mxu0
        %2019 = vst [vmem:[%s285] sm:$0xff] %v2001
        %2020 = vst [vmem:[%s285 + $0x8] sm:$0xff] %v2006
        %2021 = vst [vmem:[%s285 + $0x10] sm:$0xff] %v2011
        %2022 = vst [vmem:[%s285 + $0x18] sm:$0xff] %v2016
        %s2023 = sand.u32 %s155, 1
        %s2024 = scalar_lea.sflag [#allocation7], %s2023
        %s2025 = sand.u32 %s155, 1
        %s2026 = smul.addr %s2025, 32
        %s2027 = scalar_lea.vmem [#allocation11], %s2026
        // Predicated region
        $region57: #{tpu_custom_call.1} parent=39 // pred_check
          %p2028 = pneg %p165
        $region58: #{tpu_custom_call.1} parent=39 // pred_check_branch
          %2030 = sbr.rel (%p2028) target = $region60
        $region59: #{tpu_custom_call.1} parent=39 // pred_region
          %s2031 = smul.u32 4, %s28
          %s2033 = ssub.s32 512, 512
          %2034 = vsyncadd %s2024, %s2033
          %s2035 = smul.addr %s27, 8
          %s2036 = sadd.s32 %s2031, %s2035
          %s2037 = smul.addr %s2036, 128
          %s2038 = scalar_lea.hbm %s5, %s2037
          %s2039 = sshll.u32 %s2027, 4
          %s2040 = int_to_ptr.vmem [resolvable:$true] %s2039
          %2045 = dma.vmem_to_hbm [thread:$0]  %s2040, 512, %s2038, %s2024, 128, 128, 8
        $region60: #{tpu_custom_call.1} parent=39 // pred_fallthru
          _
      $region40: #{tpu_custom_call.1} parent=5 // pred_fallthru
        _
      %p2046 = scmp.le.s32.totalorder 2, %s18
      // Predicated region
      $region61: #{tpu_custom_call.1} parent=5 // pred_check
        %p2047 = pneg %p2046
      $region62: #{tpu_custom_call.1} parent=5 // pred_check_branch
        %2049 = sbr.rel (%p2047) target = $region64
      $region63: #{tpu_custom_call.1} parent=5 // pred_region
        %s2050 = ssub.s32 %s18, 2
        // Predicated region
        $region65: #{tpu_custom_call.1} parent=63 // pred_check
          %p2051 = pneg %p171
        $region66: #{tpu_custom_call.1} parent=63 // pred_check_branch
          %2053 = sbr.rel (%p2051) target = $region68
        $region67: #{tpu_custom_call.1} parent=63 // pred_region
          %s2054 = sand.u32 %s156, 1
          %s2055 = scalar_lea.sflag [#allocation7], %s2054
          %s2056 = sand.u32 %s156, 1
          %s2057 = smul.addr %s2056, 32
          %s2058 = scalar_lea.vmem [#allocation11], %s2057
          %2059 = dma.done %s2055, 512
        $region68: #{tpu_custom_call.1} parent=63 // pred_fallthru
          _
      $region64: #{tpu_custom_call.1} parent=5 // pred_fallthru
        _
    $region6: #{tpu_custom_call.1} parent=1 // loop_footer
      %s22 = sadd.s32 1, %s18
    $region7: #{tpu_custom_call.1} parent=1 // loop_footer_branch
      %17 = sbr.rel target = $region3
    $region8: #{tpu_custom_call.1} parent=1 // loop_exit
      _
    %2060 = vsyncpa [#allocation6], 1
    %s2061 = scalar_lea.sflag [#allocation6], 1
    %2062 = vsyncpa %s2061, 1
    %2063 = vsyncpa [#allocation9], 1
    %2064 = vsyncpa [#allocation7], 1
    %s2065 = scalar_lea.sflag [#allocation7], 1
    %2066 = vsyncpa %s2065, 1

</llo_original>
